<compile_context>
chip_gen: v7x
topology: tpu7x:2x2x1
jax: 0.10.0
libtpu: 0.0.40
codegen_flags: <defaults>
</compile_context>

<pallas_src>
import jax
import jax.numpy as jnp
import numpy as np
from jax.experimental import pallas as pl
from jax.experimental.pallas import tpu as pltpu

VIS_DIM = 2048      # ResNet50 avg-pool feature width
HIDDEN1 = 2048      # Linear1 output width
HIDDEN2 = 512       # Linear2 output width
OUT_DIM = 4         # Linear3 output width (box coordinates)
PACKED_K = 128      # lane-aligned packed [vis_small | sent | loc | 0] width


# -----------------------------------------------------------------------------
# Kernel (single step: everything resident, whole MLP in one body)
# -----------------------------------------------------------------------------
def refine_kernel(state_ref, w1q_ref, s1_ref, b1_ref,
                  w2q_ref, s2_ref, b2_ref, w3_ref, b3_ref, out_ref):
    # Linear1: (B,128)bf16 @ (128,2048)int8->bf16, f32 accumulate.
    # Per-output-channel scale factors exactly out of the dot -> apply in f32 epilogue.
    h1 = jnp.dot(state_ref[...], w1q_ref[...].astype(jnp.bfloat16),
                 preferred_element_type=jnp.float32)
    h1 = jnp.maximum(h1 * s1_ref[...] + b1_ref[...], 0.0)            # (B, 2048) f32

    # Linear2: bf16 single-pass MXU dot; int8-W2 quantization error dominates the
    # bf16 rounding of h1, so the bf16 cast is not the precision limiter.
    h2 = jnp.dot(h1.astype(jnp.bfloat16), w2q_ref[...].astype(jnp.bfloat16),
                 preferred_element_type=jnp.float32)
    h2 = jnp.maximum(h2 * s2_ref[...] + b2_ref[...], 0.0)            # (B, 512) f32

    # Linear3: tiny, keep f32.
    out = jnp.dot(h2, w3_ref[...], preferred_element_type=jnp.float32) + b3_ref[...]
    out_ref[...] = out.astype(out_ref.dtype)                          # (B, OUT_DIM)


# -----------------------------------------------------------------------------
# Wrapper (jitted so the small pre-pack fusion + pallas_call form one XLA program)
# -----------------------------------------------------------------------------
@jax.jit
def refine_forward(ref_imgs, sent_feats, location, kernel_params):
    w1q, s1, b1, w2q, s2, b2, w3, b3 = kernel_params
    B, C, H, W = ref_imgs.shape
    sent_dim = sent_feats.shape[1]
    loc_dim = location.shape[1]

    # Visual-feature stand-in pool with a lane-major (H*W)-wide reduction axis.
    vis_small = jnp.mean(ref_imgs.reshape(B, C, H * W), axis=-1)       # (B, C)

    # Pack [vis_small | sent | loc | zero-pad] into a single K=128 operand.  The
    # matching rows of Linear1 (with the visual projection folded in) live in w1q,
    # so this is mathematically identical to concat-then-Linear1.
    pad = jnp.zeros((B, PACKED_K - (C + sent_dim + loc_dim)), jnp.float32)
    state = jnp.concatenate([vis_small, sent_feats, location, pad],
                            axis=1).astype(jnp.bfloat16)               # (B, 128)

    flops = 2 * B * (PACKED_K * HIDDEN1 + HIDDEN1 * HIDDEN2 + HIDDEN2 * OUT_DIM)
    bytes_accessed = (
        PACKED_K * HIDDEN1 * 1 + HIDDEN1 * HIDDEN2 * 1                 # int8 weights
        + 2 * HIDDEN1 * 4 + 2 * HIDDEN2 * 4                            # s1,b1,s2,b2
        + HIDDEN2 * OUT_DIM * 4 + OUT_DIM * 4                          # w3,b3
        + B * PACKED_K * 2 + B * OUT_DIM * 4)                          # state in, out

    return pl.pallas_call(
        refine_kernel,
        out_shape=jax.ShapeDtypeStruct((B, OUT_DIM), jnp.float32),
        grid_spec=pltpu.PrefetchScalarGridSpec(
            num_scalar_prefetch=0,
            grid=(1,),                                                 # single step
            in_specs=[
                pl.BlockSpec((B, PACKED_K), lambda j: (0, 0)),         # packed state
                pl.BlockSpec((PACKED_K, HIDDEN1), lambda j: (0, 0)),   # W1p int8
                pl.BlockSpec((1, HIDDEN1), lambda j: (0, 0)),          # s1
                pl.BlockSpec((1, HIDDEN1), lambda j: (0, 0)),          # b1
                pl.BlockSpec((HIDDEN1, HIDDEN2), lambda j: (0, 0)),    # W2 int8
                pl.BlockSpec((1, HIDDEN2), lambda j: (0, 0)),          # s2
                pl.BlockSpec((1, HIDDEN2), lambda j: (0, 0)),          # b2
                pl.BlockSpec((HIDDEN2, OUT_DIM), lambda j: (0, 0)),    # W3
                pl.BlockSpec((1, OUT_DIM), lambda j: (0, 0)),          # b3
            ],
            out_specs=pl.BlockSpec((B, OUT_DIM), lambda j: (0, 0)),
        ),
        # ~2.6 MiB double-buffered: inside every generation's scoped VMEM default
        # (16 MiB v5e is the tightest), so no vmem_limit_bytes needed.
        compiler_params=pltpu.CompilerParams(
            dimension_semantics=("arbitrary",),
        ),
        cost_estimate=pl.CostEstimate(flops=flops, transcendentals=0,
                                      bytes_accessed=bytes_accessed),
    )(state, w1q, s1, b1, w2q, s2, b2, w3, b3)


# -----------------------------------------------------------------------------
# Parameters
# -----------------------------------------------------------------------------
def init_params(key, sent_dim, loc_dim):
    """Deterministic synthetic parameters (PyTorch nn.Linear-style uniform init).
    Weights are stored transposed w.r.t. nn.Linear, i.e. (in_dim, out_dim)."""
    ks = jax.random.split(key, 7)

    def lin_w(k, fan_in, fan_out):
        bound = 1.0 / np.sqrt(fan_in)
        return jax.random.uniform(k, (fan_in, fan_out), jnp.float32, -bound, bound)

    def lin_b(k, fan_in, fan_out):
        bound = 1.0 / np.sqrt(fan_in)
        return jax.random.uniform(k, (1, fan_out), jnp.float32, -bound, bound)

    state_size = VIS_DIM + sent_dim + loc_dim
    wproj = lin_w(ks[0], 3, VIS_DIM)            # linear stand-in for ResNet50 features
    w1 = lin_w(ks[1], state_size, HIDDEN1)
    b1 = lin_b(ks[2], state_size, HIDDEN1)
    w2 = lin_w(ks[3], HIDDEN1, HIDDEN2)
    b2 = lin_b(ks[4], HIDDEN1, HIDDEN2)
    w3 = lin_w(ks[5], HIDDEN2, OUT_DIM)
    b3 = lin_b(ks[6], HIDDEN2, OUT_DIM)
    return (wproj, w1, b1, w2, b2, w3, b3)


def _quantize_per_output_channel(w):
    """Symmetric int8 weight-only quantization with one f32 scale per output column."""
    amax = jnp.max(jnp.abs(w), axis=0, keepdims=True)                  # (1, out)
    scale = jnp.maximum(amax, 1e-30) / 127.0
    q = jnp.clip(jnp.round(w / scale), -127, 127).astype(jnp.int8)
    return q, scale.astype(jnp.float32)


def pack_params(raw_params, sent_dim, loc_dim):
    """Fold the linear visual stand-in into Linear1's visual block, pack the three
    Linear1 row-blocks into one lane-aligned (128, 2048) slab, then int8-quantize the
    two large weights with per-output-channel scales.

        (x @ Wproj) @ W1[:2048]  ==  x @ (Wproj @ W1[:2048])

    Only valid while the backbone stand-in is a pure linear projection; must be
    undone if a real ResNet feeds a 2048-wide output_avg directly."""
    wproj, w1, b1, w2, b2, w3, b3 = raw_params
    w1_vis_folded = wproj @ w1[:VIS_DIM]                               # (3, 2048)
    w1_sent = w1[VIS_DIM:VIS_DIM + sent_dim]                           # (sent_dim, 2048)
    w1_loc = w1[VIS_DIM + sent_dim:]                                   # (loc_dim, 2048)
    pad_rows = PACKED_K - (wproj.shape[0] + sent_dim + loc_dim)
    w1p = jnp.concatenate(
        [w1_vis_folded, w1_sent, w1_loc,
         jnp.zeros((pad_rows, HIDDEN1), jnp.float32)], axis=0)         # (128, 2048)
    w1q, s1 = _quantize_per_output_channel(w1p)
    w2q, s2 = _quantize_per_output_channel(w2)
    return (w1q, s1, b1, w2q, s2, b2, w3, b3)


def refine_reference(ref_imgs, sent_feats, location, raw_params):
    """Pure-JAX f32 reference of the module's forward pass (with the same stand-in)."""
    wproj, w1, b1, w2, b2, w3, b3 = raw_params
    vis = jnp.mean(ref_imgs, axis=(2, 3)) @ wproj                      # output_avg stand-in
    state = jnp.concatenate([vis, sent_feats, location], axis=1)
    h1 = jnp.maximum(state @ w1 + b1, 0.0)
    h2 = jnp.maximum(h1 @ w2 + b2, 0.0)
    return h2 @ w3 + b3


# -----------------------------------------------------------------------------
# Main
# -----------------------------------------------------------------------------
if __name__ == "__main__":
    key = jax.random.PRNGKey(0)
    k_img, k_sent, k_loc, k_par = jax.random.split(key, 4)

    B, C, H, W = 2, 3, 16, 16       # small NCHW image batch
    sent_dim, loc_dim = 32, 8       # state_size = 2048 + 32 + 8 = 2088

    ref_imgs = jax.random.normal(k_img, (B, C, H, W), jnp.float32)
    sent_feats = jax.random.normal(k_sent, (B, sent_dim), jnp.float32)
    location = jax.random.normal(k_loc, (B, loc_dim), jnp.float32)

    raw_params = init_params(k_par, sent_dim, loc_dim)
    kernel_params = pack_params(raw_params, sent_dim, loc_dim)

    coords = refine_forward(ref_imgs, sent_feats, location, kernel_params)
    jax.block_until_ready(coords)
    assert coords.shape == (B, OUT_DIM) and coords.dtype == jnp.float32

    # Numerical check vs. the f32 reference (int8 weights + bf16 acts => loose tol).
    ref = refine_reference(ref_imgs, sent_feats, location, raw_params)
    np.testing.assert_allclose(np.asarray(coords), np.asarray(ref),
                               rtol=5e-2, atol=5e-2)

    print("KERNEL_OK")
</pallas_src>

<mosaic_0001>
module attributes {stable_mosaic.version = 11 : i64} {
  func.func @refine_kernel(%arg0: i32, %arg1: memref<2x128xbf16, #tpu.memory_space<vmem>>, %arg2: memref<128x2048xi8, #tpu.memory_space<vmem>>, %arg3: memref<1x2048xf32, #tpu.memory_space<vmem>>, %arg4: memref<1x2048xf32, #tpu.memory_space<vmem>>, %arg5: memref<2048x512xi8, #tpu.memory_space<vmem>>, %arg6: memref<1x512xf32, #tpu.memory_space<vmem>>, %arg7: memref<1x512xf32, #tpu.memory_space<vmem>>, %arg8: memref<512x4xf32, #tpu.memory_space<vmem>>, %arg9: memref<1x4xf32, #tpu.memory_space<vmem>>, %arg10: memref<2x4xf32, #tpu.memory_space<vmem>>) attributes {dimension_semantics = [#tpu.dimension_semantics<arbitrary>], iteration_bounds = array<i64: 1>, scalar_prefetch = 0 : i64, scratch_operands = 0 : i64, tpu.core_type = #tpu.core_type<tc>, window_params = [{pipeline_mode = #tpu.pipeline_mode<synchronous>, transform_indices = @transform_0, window_bounds = array<i64: 2, 128>}, {pipeline_mode = #tpu.pipeline_mode<synchronous>, transform_indices = @transform_1, window_bounds = array<i64: 128, 2048>}, {pipeline_mode = #tpu.pipeline_mode<synchronous>, transform_indices = @transform_2, window_bounds = array<i64: 1, 2048>}, {pipeline_mode = #tpu.pipeline_mode<synchronous>, transform_indices = @transform_3, window_bounds = array<i64: 1, 2048>}, {pipeline_mode = #tpu.pipeline_mode<synchronous>, transform_indices = @transform_4, window_bounds = array<i64: 2048, 512>}, {pipeline_mode = #tpu.pipeline_mode<synchronous>, transform_indices = @transform_5, window_bounds = array<i64: 1, 512>}, {pipeline_mode = #tpu.pipeline_mode<synchronous>, transform_indices = @transform_6, window_bounds = array<i64: 1, 512>}, {pipeline_mode = #tpu.pipeline_mode<synchronous>, transform_indices = @transform_7, window_bounds = array<i64: 512, 4>}, {pipeline_mode = #tpu.pipeline_mode<synchronous>, transform_indices = @transform_8, window_bounds = array<i64: 1, 4>}, {pipeline_mode = #tpu.pipeline_mode<synchronous>, transform_indices = @transform_9, window_bounds = array<i64: 2, 4>}]} {
    %c0 = arith.constant 0 : index
    %c0_0 = arith.constant 0 : index
    %0 = vector.load %arg1[%c0, %c0_0] : memref<2x128xbf16, #tpu.memory_space<vmem>>, vector<2x128xbf16>
    %c0_1 = arith.constant 0 : index
    %c0_2 = arith.constant 0 : index
    %1 = vector.load %arg2[%c0_1, %c0_2] : memref<128x2048xi8, #tpu.memory_space<vmem>>, vector<128x2048xi8>
    %2 = arith.sitofp %1 : vector<128x2048xi8> to vector<128x2048xbf16>
    %cst = arith.constant dense<0.000000e+00> : vector<2x2048xf32>
    %3 = tpu.matmul %0, %2, %cst {dimension_numbers = #tpu.dot_dimension_numbers<[1], [0], [0], [1], [0, 0, 1, 1], [], []>} : vector<2x128xbf16>, vector<128x2048xbf16>, vector<2x2048xf32> -> vector<2x2048xf32>
    %c0_3 = arith.constant 0 : index
    %c0_4 = arith.constant 0 : index
    %4 = vector.load %arg3[%c0_3, %c0_4] : memref<1x2048xf32, #tpu.memory_space<vmem>>, vector<1x2048xf32>
    %5 = vector.broadcast %4 : vector<1x2048xf32> to vector<2x2048xf32>
    %6 = arith.mulf %3, %5 : vector<2x2048xf32>
    %c0_5 = arith.constant 0 : index
    %c0_6 = arith.constant 0 : index
    %7 = vector.load %arg4[%c0_5, %c0_6] : memref<1x2048xf32, #tpu.memory_space<vmem>>, vector<1x2048xf32>
    %8 = vector.broadcast %7 : vector<1x2048xf32> to vector<2x2048xf32>
    %9 = arith.addf %6, %8 : vector<2x2048xf32>
    %cst_7 = arith.constant 0.000000e+00 : f32
    %10 = vector.broadcast %cst_7 : f32 to vector<2x2048xf32>
    %11 = arith.maximumf %9, %10 : vector<2x2048xf32>
    %12 = arith.truncf %11 : vector<2x2048xf32> to vector<2x2048xbf16>
    %c0_8 = arith.constant 0 : index
    %c0_9 = arith.constant 0 : index
    %13 = vector.load %arg5[%c0_8, %c0_9] : memref<2048x512xi8, #tpu.memory_space<vmem>>, vector<2048x512xi8>
    %14 = arith.sitofp %13 : vector<2048x512xi8> to vector<2048x512xbf16>
    %cst_10 = arith.constant dense<0.000000e+00> : vector<2x512xf32>
    %15 = tpu.matmul %12, %14, %cst_10 {dimension_numbers = #tpu.dot_dimension_numbers<[1], [0], [0], [1], [0, 0, 1, 1], [], []>} : vector<2x2048xbf16>, vector<2048x512xbf16>, vector<2x512xf32> -> vector<2x512xf32>
    %c0_11 = arith.constant 0 : index
    %c0_12 = arith.constant 0 : index
    %16 = vector.load %arg6[%c0_11, %c0_12] : memref<1x512xf32, #tpu.memory_space<vmem>>, vector<1x512xf32>
    %17 = vector.broadcast %16 : vector<1x512xf32> to vector<2x512xf32>
    %18 = arith.mulf %15, %17 : vector<2x512xf32>
    %c0_13 = arith.constant 0 : index
    %c0_14 = arith.constant 0 : index
    %19 = vector.load %arg7[%c0_13, %c0_14] : memref<1x512xf32, #tpu.memory_space<vmem>>, vector<1x512xf32>
    %20 = vector.broadcast %19 : vector<1x512xf32> to vector<2x512xf32>
    %21 = arith.addf %18, %20 : vector<2x512xf32>
    %cst_15 = arith.constant 0.000000e+00 : f32
    %22 = vector.broadcast %cst_15 : f32 to vector<2x512xf32>
    %23 = arith.maximumf %21, %22 : vector<2x512xf32>
    %c0_16 = arith.constant 0 : index
    %c0_17 = arith.constant 0 : index
    %24 = vector.load %arg8[%c0_16, %c0_17] : memref<512x4xf32, #tpu.memory_space<vmem>>, vector<512x4xf32>
    %cst_18 = arith.constant dense<0.000000e+00> : vector<2x4xf32>
    %25 = tpu.matmul %23, %24, %cst_18 {dimension_numbers = #tpu.dot_dimension_numbers<[1], [0], [0], [1], [0, 0, 1, 1], [], []>} : vector<2x512xf32>, vector<512x4xf32>, vector<2x4xf32> -> vector<2x4xf32>
    %c0_19 = arith.constant 0 : index
    %c0_20 = arith.constant 0 : index
    %26 = vector.load %arg9[%c0_19, %c0_20] : memref<1x4xf32, #tpu.memory_space<vmem>>, vector<1x4xf32>
    %27 = vector.broadcast %26 : vector<1x4xf32> to vector<2x4xf32>
    %28 = arith.addf %25, %27 : vector<2x4xf32>
    %c0_21 = arith.constant 0 : index
    %c0_22 = arith.constant 0 : index
    %29 = vector.load %arg10[%c0_21, %c0_22] : memref<2x4xf32, #tpu.memory_space<vmem>>, vector<2x4xf32>
    tpu.vector_store %arg10[%c0_21, %c0_22], %28 {strides = array<i32>} : memref<2x4xf32, #tpu.memory_space<vmem>>, vector<2x4xf32>,
    return
  }
  func.func @transform_0(%arg0: i32) -> (i32, i32) {
    %c0_i32 = arith.constant 0 : i32
    %c0_i32_0 = arith.constant 0 : i32
    %c0_i32_1 = arith.constant 0 : i32
    return %c0_i32, %c0_i32_0 : i32, i32
  }
  func.func @transform_1(%arg0: i32) -> (i32, i32) {
    %c0_i32 = arith.constant 0 : i32
    %c0_i32_0 = arith.constant 0 : i32
    %c0_i32_1 = arith.constant 0 : i32
    return %c0_i32, %c0_i32_0 : i32, i32
  }
  func.func @transform_2(%arg0: i32) -> (i32, i32) {
    %c0_i32 = arith.constant 0 : i32
    %c0_i32_0 = arith.constant 0 : i32
    %c0_i32_1 = arith.constant 0 : i32
    return %c0_i32, %c0_i32_0 : i32, i32
  }
  func.func @transform_3(%arg0: i32) -> (i32, i32) {
    %c0_i32 = arith.constant 0 : i32
    %c0_i32_0 = arith.constant 0 : i32
    %c0_i32_1 = arith.constant 0 : i32
    return %c0_i32, %c0_i32_0 : i32, i32
  }
  func.func @transform_4(%arg0: i32) -> (i32, i32) {
    %c0_i32 = arith.constant 0 : i32
    %c0_i32_0 = arith.constant 0 : i32
    %c0_i32_1 = arith.constant 0 : i32
    return %c0_i32, %c0_i32_0 : i32, i32
  }
  func.func @transform_5(%arg0: i32) -> (i32, i32) {
    %c0_i32 = arith.constant 0 : i32
    %c0_i32_0 = arith.constant 0 : i32
    %c0_i32_1 = arith.constant 0 : i32
    return %c0_i32, %c0_i32_0 : i32, i32
  }
  func.func @transform_6(%arg0: i32) -> (i32, i32) {
    %c0_i32 = arith.constant 0 : i32
    %c0_i32_0 = arith.constant 0 : i32
    %c0_i32_1 = arith.constant 0 : i32
    return %c0_i32, %c0_i32_0 : i32, i32
  }
  func.func @transform_7(%arg0: i32) -> (i32, i32) {
    %c0_i32 = arith.constant 0 : i32
    %c0_i32_0 = arith.constant 0 : i32
    %c0_i32_1 = arith.constant 0 : i32
    return %c0_i32, %c0_i32_0 : i32, i32
  }
  func.func @transform_8(%arg0: i32) -> (i32, i32) {
    %c0_i32 = arith.constant 0 : i32
    %c0_i32_0 = arith.constant 0 : i32
    %c0_i32_1 = arith.constant 0 : i32
    return %c0_i32, %c0_i32_0 : i32, i32
  }
  func.func @transform_9(%arg0: i32) -> (i32, i32) {
    %c0_i32 = arith.constant 0 : i32
    %c0_i32_0 = arith.constant 0 : i32
    %c0_i32_1 = arith.constant 0 : i32
    return %c0_i32, %c0_i32_0 : i32, i32
  }
}

</mosaic_0001>

<llo_original>
// kernel: refine_forward.1
$region0: #{refine_forward.1}
  #allocation0 [shape = 'u32[]', space=smem, size = 0x4, offset = 0x4, fixed_abs, tag = 'smem constant byte address 0x4 - core index']
  #allocation1 [shape = 'u32[144,128]{1,0:T(1,128)}', space=vmem, size = 0x12000, scoped, tag = 'internal scratch']
  %s0 = inlined_call_operand.vmem [shape: bf16[2,128], index: 0, kind: input, shape index: {}]
  %s1 = inlined_call_operand.vmem [shape: s8[128,2048], index: 1, kind: input, shape index: {}]
  %s2 = inlined_call_operand.vmem [shape: f32[1,2048], index: 2, kind: input, shape index: {}]
  %s3 = inlined_call_operand.vmem [shape: f32[1,2048], index: 3, kind: input, shape index: {}]
  %s4 = inlined_call_operand.hbm [shape: s8[2048,512], index: 4, kind: input, shape index: {}]
  %s5 = inlined_call_operand.vmem [shape: f32[1,512], index: 5, kind: input, shape index: {}]
  %s6 = inlined_call_operand.vmem [shape: f32[1,512], index: 6, kind: input, shape index: {}]
  %s7 = inlined_call_operand.vmem [shape: f32[512,4], index: 7, kind: input, shape index: {}]
  %s8 = inlined_call_operand.vmem [shape: f32[1,4], index: 8, kind: input, shape index: {}]
  %s9 = inlined_call_operand.hbm [shape: f32[2,4], index: 9, kind: output, shape index: {}]
  %s10 = sld [smem:[#allocation0]]
  $region50: #{refine_forward.1} parent=0
    _
  %s12 = ssub.s32 1, %s10
  %s13 = scalar_select 0, %s12, %s10
  $region1: #{refine_forward.1} parent=0
    #allocation2 [shape = 'u8[1048576]{0}', space=vmem, size = 0x100000, scoped, tag = 'input window, operand 4, single buffered']
    #allocation3 [shape = 's32[1]{0}', space=sflag, size = 0x4, scoped, tag = 'scoped memory for refine_forward.1']
    #allocation4 [shape = 's32[1]{0}', space=sflag, size = 0x4, scoped, tag = 'scoped memory for refine_forward.1']
    #allocation5 [shape = 'u8[1024]{0}', space=vmem, size = 0x400, scoped, tag = 'output window, operand 0, single buffered']
    %14 = vsyncpa [#allocation3], 0
    %15 = vsyncpa [#allocation4], 0
    // Predicated region
    $region2: #{refine_forward.1} parent=1 // pred_check
      _
    $region3: #{refine_forward.1} parent=1 // pred_check_branch
      %17 = sbr.rel (0) target = $region5
    $region4: #{refine_forward.1} parent=1 // pred_region
      _
    $region5: #{refine_forward.1} parent=1 // pred_fallthru
      _
    // Predicated region
    $region6: #{refine_forward.1} parent=1 // pred_check
      _
    $region7: #{refine_forward.1} parent=1 // pred_check_branch
      %19 = sbr.rel (0) target = $region9
    $region8: #{refine_forward.1} parent=1 // pred_region
      _
    $region9: #{refine_forward.1} parent=1 // pred_fallthru
      _
    // Predicated region
    $region10: #{refine_forward.1} parent=1 // pred_check
      _
    $region11: #{refine_forward.1} parent=1 // pred_check_branch
      %21 = sbr.rel (0) target = $region13
    $region12: #{refine_forward.1} parent=1 // pred_region
      _
    $region13: #{refine_forward.1} parent=1 // pred_fallthru
      _
    // Predicated region
    $region14: #{refine_forward.1} parent=1 // pred_check
      _
    $region15: #{refine_forward.1} parent=1 // pred_check_branch
      %23 = sbr.rel (0) target = $region17
    $region16: #{refine_forward.1} parent=1 // pred_region
      _
    $region17: #{refine_forward.1} parent=1 // pred_fallthru
      _
    // Predicated region
    $region18: #{refine_forward.1} parent=1 // pred_check
      _
    $region19: #{refine_forward.1} parent=1 // pred_check_branch
      %25 = sbr.rel (0) target = $region21
    $region20: #{refine_forward.1} parent=1 // pred_region
      %s27 = ssub.s32 32768, 32768
      %28 = vsyncadd [#allocation3], %s27
      %s29 = sshll.u32 [#allocation2], 4
      %s30 = int_to_ptr.vmem [resolvable:$true] %s29
      %35 = dma.hbm_to_vmem [thread:$0]  %s4, 32768, %s30, [#allocation3], 512, 512, 32
    $region21: #{refine_forward.1} parent=1 // pred_fallthru
      _
    // Predicated region
    $region22: #{refine_forward.1} parent=1 // pred_check
      _
    $region23: #{refine_forward.1} parent=1 // pred_check_branch
      %37 = sbr.rel (0) target = $region25
    $region24: #{refine_forward.1} parent=1 // pred_region
      _
    $region25: #{refine_forward.1} parent=1 // pred_fallthru
      _
    // Predicated region
    $region26: #{refine_forward.1} parent=1 // pred_check
      _
    $region27: #{refine_forward.1} parent=1 // pred_check_branch
      %39 = sbr.rel (0) target = $region29
    $region28: #{refine_forward.1} parent=1 // pred_region
      _
    $region29: #{refine_forward.1} parent=1 // pred_fallthru
      _
    // Predicated region
    $region30: #{refine_forward.1} parent=1 // pred_check
      _
    $region31: #{refine_forward.1} parent=1 // pred_check_branch
      %41 = sbr.rel (0) target = $region33
    $region32: #{refine_forward.1} parent=1 // pred_region
      _
    $region33: #{refine_forward.1} parent=1 // pred_fallthru
      _
    // Predicated region
    $region34: #{refine_forward.1} parent=1 // pred_check
      _
    $region35: #{refine_forward.1} parent=1 // pred_check_branch
      %43 = sbr.rel (0) target = $region37
    $region36: #{refine_forward.1} parent=1 // pred_region
      _
    $region37: #{refine_forward.1} parent=1 // pred_fallthru
      _
    // Predicated region
    $region38: #{refine_forward.1} parent=1 // pred_check
      _
    $region39: #{refine_forward.1} parent=1 // pred_check_branch
      %45 = sbr.rel (0) target = $region41
    $region40: #{refine_forward.1} parent=1 // pred_region
      %46 = dma.done [#allocation3], 32768
    $region41: #{refine_forward.1} parent=1 // pred_fallthru
      _
    %v48 = vld [vmem:[%s0] sm:$0x1]
    %v49 = vld [vmem:[%s1] sm:$0xff]
    %v50 = vld [vmem:[%s1 + $0x8] sm:$0xff]
    %v51 = vld [vmem:[%s1 + $0x10] sm:$0xff]
    %v52 = vld [vmem:[%s1 + $0x18] sm:$0xff]
    %v53 = vld [vmem:[%s1 + $0x20] sm:$0xff]
    %v54 = vld [vmem:[%s1 + $0x28] sm:$0xff]
    %v55 = vld [vmem:[%s1 + $0x30] sm:$0xff]
    %v56 = vld [vmem:[%s1 + $0x38] sm:$0xff]
    %v57 = vld [vmem:[%s1 + $0x40] sm:$0xff]
    %v58 = vld [vmem:[%s1 + $0x48] sm:$0xff]
    %v59 = vld [vmem:[%s1 + $0x50] sm:$0xff]
    %v60 = vld [vmem:[%s1 + $0x58] sm:$0xff]
    %v61 = vld [vmem:[%s1 + $0x60] sm:$0xff]
    %v62 = vld [vmem:[%s1 + $0x68] sm:$0xff]
    %v63 = vld [vmem:[%s1 + $0x70] sm:$0xff]
    %v64 = vld [vmem:[%s1 + $0x78] sm:$0xff]
    %v65 = vld [vmem:[%s1 + $0x80] sm:$0xff]
    %v66 = vld [vmem:[%s1 + $0x88] sm:$0xff]
    %v67 = vld [vmem:[%s1 + $0x90] sm:$0xff]
    %v68 = vld [vmem:[%s1 + $0x98] sm:$0xff]
    %v69 = vld [vmem:[%s1 + $0xa0] sm:$0xff]
    %v70 = vld [vmem:[%s1 + $0xa8] sm:$0xff]
    %v71 = vld [vmem:[%s1 + $0xb0] sm:$0xff]
    %v72 = vld [vmem:[%s1 + $0xb8] sm:$0xff]
    %v73 = vld [vmem:[%s1 + $0xc0] sm:$0xff]
    %v74 = vld [vmem:[%s1 + $0xc8] sm:$0xff]
    %v75 = vld [vmem:[%s1 + $0xd0] sm:$0xff]
    %v76 = vld [vmem:[%s1 + $0xd8] sm:$0xff]
    %v77 = vld [vmem:[%s1 + $0xe0] sm:$0xff]
    %v78 = vld [vmem:[%s1 + $0xe8] sm:$0xff]
    %v79 = vld [vmem:[%s1 + $0xf0] sm:$0xff]
    %v80 = vld [vmem:[%s1 + $0xf8] sm:$0xff]
    %v81 = vld [vmem:[%s1 + $0x100] sm:$0xff]
    %v82 = vld [vmem:[%s1 + $0x108] sm:$0xff]
    %v83 = vld [vmem:[%s1 + $0x110] sm:$0xff]
    %v84 = vld [vmem:[%s1 + $0x118] sm:$0xff]
    %v85 = vld [vmem:[%s1 + $0x120] sm:$0xff]
    %v86 = vld [vmem:[%s1 + $0x128] sm:$0xff]
    %v87 = vld [vmem:[%s1 + $0x130] sm:$0xff]
    %v88 = vld [vmem:[%s1 + $0x138] sm:$0xff]
    %v89 = vld [vmem:[%s1 + $0x140] sm:$0xff]
    %v90 = vld [vmem:[%s1 + $0x148] sm:$0xff]
    %v91 = vld [vmem:[%s1 + $0x150] sm:$0xff]
    %v92 = vld [vmem:[%s1 + $0x158] sm:$0xff]
    %v93 = vld [vmem:[%s1 + $0x160] sm:$0xff]
    %v94 = vld [vmem:[%s1 + $0x168] sm:$0xff]
    %v95 = vld [vmem:[%s1 + $0x170] sm:$0xff]
    %v96 = vld [vmem:[%s1 + $0x178] sm:$0xff]
    %v97 = vld [vmem:[%s1 + $0x180] sm:$0xff]
    %v98 = vld [vmem:[%s1 + $0x188] sm:$0xff]
    %v99 = vld [vmem:[%s1 + $0x190] sm:$0xff]
    %v100 = vld [vmem:[%s1 + $0x198] sm:$0xff]
    %v101 = vld [vmem:[%s1 + $0x1a0] sm:$0xff]
    %v102 = vld [vmem:[%s1 + $0x1a8] sm:$0xff]
    %v103 = vld [vmem:[%s1 + $0x1b0] sm:$0xff]
    %v104 = vld [vmem:[%s1 + $0x1b8] sm:$0xff]
    %v105 = vld [vmem:[%s1 + $0x1c0] sm:$0xff]
    %v106 = vld [vmem:[%s1 + $0x1c8] sm:$0xff]
    %v107 = vld [vmem:[%s1 + $0x1d0] sm:$0xff]
    %v108 = vld [vmem:[%s1 + $0x1d8] sm:$0xff]
    %v109 = vld [vmem:[%s1 + $0x1e0] sm:$0xff]
    %v110 = vld [vmem:[%s1 + $0x1e8] sm:$0xff]
    %v111 = vld [vmem:[%s1 + $0x1f0] sm:$0xff]
    %v112 = vld [vmem:[%s1 + $0x1f8] sm:$0xff]
    %v113 = vunpack.c.l.s8.bf16 %v49
    %v114 = vunpack.c.l.s8.bf16 %v50
    %v115 = vunpack.c.l.s8.bf16 %v51
    %v116 = vunpack.c.l.s8.bf16 %v52
    %v117 = vunpack.c.l.s8.bf16 %v53
    %v118 = vunpack.c.l.s8.bf16 %v54
    %v119 = vunpack.c.l.s8.bf16 %v55
    %v120 = vunpack.c.l.s8.bf16 %v56
    %v121 = vunpack.c.l.s8.bf16 %v57
    %v122 = vunpack.c.l.s8.bf16 %v58
    %v123 = vunpack.c.l.s8.bf16 %v59
    %v124 = vunpack.c.l.s8.bf16 %v60
    %v125 = vunpack.c.l.s8.bf16 %v61
    %v126 = vunpack.c.l.s8.bf16 %v62
    %v127 = vunpack.c.l.s8.bf16 %v63
    %v128 = vunpack.c.l.s8.bf16 %v64
    %v129 = vunpack.c.h.s8.bf16 %v49
    %v130 = vunpack.c.h.s8.bf16 %v50
    %v131 = vunpack.c.h.s8.bf16 %v51
    %v132 = vunpack.c.h.s8.bf16 %v52
    %v133 = vunpack.c.h.s8.bf16 %v53
    %v134 = vunpack.c.h.s8.bf16 %v54
    %v135 = vunpack.c.h.s8.bf16 %v55
    %v136 = vunpack.c.h.s8.bf16 %v56
    %v137 = vunpack.c.h.s8.bf16 %v57
    %v138 = vunpack.c.h.s8.bf16 %v58
    %v139 = vunpack.c.h.s8.bf16 %v59
    %v140 = vunpack.c.h.s8.bf16 %v60
    %v141 = vunpack.c.h.s8.bf16 %v61
    %v142 = vunpack.c.h.s8.bf16 %v62
    %v143 = vunpack.c.h.s8.bf16 %v63
    %v144 = vunpack.c.h.s8.bf16 %v64
    %v145 = vunpack.c.l.s8.bf16 %v65
    %v146 = vunpack.c.l.s8.bf16 %v66
    %v147 = vunpack.c.l.s8.bf16 %v67
    %v148 = vunpack.c.l.s8.bf16 %v68
    %v149 = vunpack.c.l.s8.bf16 %v69
    %v150 = vunpack.c.l.s8.bf16 %v70
    %v151 = vunpack.c.l.s8.bf16 %v71
    %v152 = vunpack.c.l.s8.bf16 %v72
    %v153 = vunpack.c.l.s8.bf16 %v73
    %v154 = vunpack.c.l.s8.bf16 %v74
    %v155 = vunpack.c.l.s8.bf16 %v75
    %v156 = vunpack.c.l.s8.bf16 %v76
    %v157 = vunpack.c.l.s8.bf16 %v77
    %v158 = vunpack.c.l.s8.bf16 %v78
    %v159 = vunpack.c.l.s8.bf16 %v79
    %v160 = vunpack.c.l.s8.bf16 %v80
    %v161 = vunpack.c.h.s8.bf16 %v65
    %v162 = vunpack.c.h.s8.bf16 %v66
    %v163 = vunpack.c.h.s8.bf16 %v67
    %v164 = vunpack.c.h.s8.bf16 %v68
    %v165 = vunpack.c.h.s8.bf16 %v69
    %v166 = vunpack.c.h.s8.bf16 %v70
    %v167 = vunpack.c.h.s8.bf16 %v71
    %v168 = vunpack.c.h.s8.bf16 %v72
    %v169 = vunpack.c.h.s8.bf16 %v73
    %v170 = vunpack.c.h.s8.bf16 %v74
    %v171 = vunpack.c.h.s8.bf16 %v75
    %v172 = vunpack.c.h.s8.bf16 %v76
    %v173 = vunpack.c.h.s8.bf16 %v77
    %v174 = vunpack.c.h.s8.bf16 %v78
    %v175 = vunpack.c.h.s8.bf16 %v79
    %v176 = vunpack.c.h.s8.bf16 %v80
    %v177 = vunpack.c.l.s8.bf16 %v81
    %v178 = vunpack.c.l.s8.bf16 %v82
    %v179 = vunpack.c.l.s8.bf16 %v83
    %v180 = vunpack.c.l.s8.bf16 %v84
    %v181 = vunpack.c.l.s8.bf16 %v85
    %v182 = vunpack.c.l.s8.bf16 %v86
    %v183 = vunpack.c.l.s8.bf16 %v87
    %v184 = vunpack.c.l.s8.bf16 %v88
    %v185 = vunpack.c.l.s8.bf16 %v89
    %v186 = vunpack.c.l.s8.bf16 %v90
    %v187 = vunpack.c.l.s8.bf16 %v91
    %v188 = vunpack.c.l.s8.bf16 %v92
    %v189 = vunpack.c.l.s8.bf16 %v93
    %v190 = vunpack.c.l.s8.bf16 %v94
    %v191 = vunpack.c.l.s8.bf16 %v95
    %v192 = vunpack.c.l.s8.bf16 %v96
    %v193 = vunpack.c.h.s8.bf16 %v81
    %v194 = vunpack.c.h.s8.bf16 %v82
    %v195 = vunpack.c.h.s8.bf16 %v83
    %v196 = vunpack.c.h.s8.bf16 %v84
    %v197 = vunpack.c.h.s8.bf16 %v85
    %v198 = vunpack.c.h.s8.bf16 %v86
    %v199 = vunpack.c.h.s8.bf16 %v87
    %v200 = vunpack.c.h.s8.bf16 %v88
    %v201 = vunpack.c.h.s8.bf16 %v89
    %v202 = vunpack.c.h.s8.bf16 %v90
    %v203 = vunpack.c.h.s8.bf16 %v91
    %v204 = vunpack.c.h.s8.bf16 %v92
    %v205 = vunpack.c.h.s8.bf16 %v93
    %v206 = vunpack.c.h.s8.bf16 %v94
    %v207 = vunpack.c.h.s8.bf16 %v95
    %v208 = vunpack.c.h.s8.bf16 %v96
    %v209 = vunpack.c.l.s8.bf16 %v97
    %v210 = vunpack.c.l.s8.bf16 %v98
    %v211 = vunpack.c.l.s8.bf16 %v99
    %v212 = vunpack.c.l.s8.bf16 %v100
    %v213 = vunpack.c.l.s8.bf16 %v101
    %v214 = vunpack.c.l.s8.bf16 %v102
    %v215 = vunpack.c.l.s8.bf16 %v103
    %v216 = vunpack.c.l.s8.bf16 %v104
    %v217 = vunpack.c.l.s8.bf16 %v105
    %v218 = vunpack.c.l.s8.bf16 %v106
    %v219 = vunpack.c.l.s8.bf16 %v107
    %v220 = vunpack.c.l.s8.bf16 %v108
    %v221 = vunpack.c.l.s8.bf16 %v109
    %v222 = vunpack.c.l.s8.bf16 %v110
    %v223 = vunpack.c.l.s8.bf16 %v111
    %v224 = vunpack.c.l.s8.bf16 %v112
    %v225 = vunpack.c.h.s8.bf16 %v97
    %v226 = vunpack.c.h.s8.bf16 %v98
    %v227 = vunpack.c.h.s8.bf16 %v99
    %v228 = vunpack.c.h.s8.bf16 %v100
    %v229 = vunpack.c.h.s8.bf16 %v101
    %v230 = vunpack.c.h.s8.bf16 %v102
    %v231 = vunpack.c.h.s8.bf16 %v103
    %v232 = vunpack.c.h.s8.bf16 %v104
    %v233 = vunpack.c.h.s8.bf16 %v105
    %v234 = vunpack.c.h.s8.bf16 %v106
    %v235 = vunpack.c.h.s8.bf16 %v107
    %v236 = vunpack.c.h.s8.bf16 %v108
    %v237 = vunpack.c.h.s8.bf16 %v109
    %v238 = vunpack.c.h.s8.bf16 %v110
    %v239 = vunpack.c.h.s8.bf16 %v111
    %v240 = vunpack.c.h.s8.bf16 %v112
    %241 = vmatprep.subr.bf16.mxu0 %v114
    %242 = vmatpush1.bf16.msra.mxu0 %v113
    %243 = vmatprep.subr.bf16.mxu0 %v130
    %244 = vmatpush1.bf16.msra.mxu0 %v129
    %245 = vmatprep.subr.bf16.mxu0 %v146
    %246 = vmatpush1.bf16.msra.mxu0 %v145
    %247 = vmatprep.subr.bf16.mxu0 %v162
    %248 = vmatpush1.bf16.msra.mxu0 %v161
    %249 = vmatprep.subr.bf16.mxu0 %v178
    %250 = vmatpush1.bf16.msra.mxu0 %v177
    %251 = vmatprep.subr.bf16.mxu0 %v194
    %252 = vmatpush1.bf16.msra.mxu0 %v193
    %253 = vmatprep.subr.bf16.mxu0 %v210
    %254 = vmatpush1.bf16.msra.mxu0 %v209
    %255 = vmatprep.subr.bf16.mxu0 %v226
    %256 = vmatpush1.bf16.msra.mxu0 %v225
    %257 = vmatprep.subr.bf16.mxu0 0
    %258 = vmatpush1.bf16.msra.mxu0 0
    %259 = vmatprep.subr.bf16.mxu0 0
    %260 = vmatpush1.bf16.msra.mxu0 0
    %261 = vmatprep.subr.bf16.mxu0 0
    %262 = vmatpush1.bf16.msra.mxu0 0
    %263 = vmatprep.subr.bf16.mxu0 0
    %264 = vmatpush1.bf16.msra.mxu0 0
    %265 = vmatprep.subr.bf16.mxu0 0
    %266 = vmatpush1.bf16.msra.mxu0 0
    %267 = vmatprep.subr.bf16.mxu0 0
    %268 = vmatpush1.bf16.msra.mxu0 0
    %269 = vmatprep.subr.bf16.mxu0 0
    %270 = vmatpush1.bf16.msra.mxu0 0
    %271 = vmatprep.subr.bf16.mxu0 0
    %272 = vmatpush1.bf16.msra.mxu0 0
    %273 = vmatprep.mubr.bf16.mxu0 0
    %274 = vmatmul.mubr.bf16.gmra.mrb[0].mxu0 %v48
    %v275 = vpop.f32.mrb[0].mxu0
    %v276 = vadd.f32 0.0, %v275
    %v277 = vpop.f32.mrb[0].mxu0
    %v278 = vadd.f32 0.0, %v277
    %v279 = vpop.f32.mrb[0].mxu0
    %v280 = vpop.f32.mrb[0].mxu0
    %281 = vdwg.mxu0
    %282 = vmatprep.subr.bf16.mxu0 %v116
    %283 = vmatpush1.bf16.msra.mxu0 %v115
    %284 = vmatprep.subr.bf16.mxu0 %v132
    %285 = vmatpush1.bf16.msra.mxu0 %v131
    %286 = vmatprep.subr.bf16.mxu0 %v148
    %287 = vmatpush1.bf16.msra.mxu0 %v147
    %288 = vmatprep.subr.bf16.mxu0 %v164
    %289 = vmatpush1.bf16.msra.mxu0 %v163
    %290 = vmatprep.subr.bf16.mxu0 %v180
    %291 = vmatpush1.bf16.msra.mxu0 %v179
    %292 = vmatprep.subr.bf16.mxu0 %v196
    %293 = vmatpush1.bf16.msra.mxu0 %v195
    %294 = vmatprep.subr.bf16.mxu0 %v212
    %295 = vmatpush1.bf16.msra.mxu0 %v211
    %296 = vmatprep.subr.bf16.mxu0 %v228
    %297 = vmatpush1.bf16.msra.mxu0 %v227
    %298 = vmatprep.subr.bf16.mxu0 0
    %299 = vmatpush1.bf16.msra.mxu0 0
    %300 = vmatprep.subr.bf16.mxu0 0
    %301 = vmatpush1.bf16.msra.mxu0 0
    %302 = vmatprep.subr.bf16.mxu0 0
    %303 = vmatpush1.bf16.msra.mxu0 0
    %304 = vmatprep.subr.bf16.mxu0 0
    %305 = vmatpush1.bf16.msra.mxu0 0
    %306 = vmatprep.subr.bf16.mxu0 0
    %307 = vmatpush1.bf16.msra.mxu0 0
    %308 = vmatprep.subr.bf16.mxu0 0
    %309 = vmatpush1.bf16.msra.mxu0 0
    %310 = vmatprep.subr.bf16.mxu0 0
    %311 = vmatpush1.bf16.msra.mxu0 0
    %312 = vmatprep.subr.bf16.mxu0 0
    %313 = vmatpush1.bf16.msra.mxu0 0
    %314 = vmatprep.mubr.bf16.mxu0 0
    %315 = vmatmul.mubr.bf16.gmra.mrb[0].mxu0 %v48
    %v316 = vpop.f32.mrb[0].mxu0
    %v317 = vadd.f32 0.0, %v316
    %v318 = vpop.f32.mrb[0].mxu0
    %v319 = vadd.f32 0.0, %v318
    %v320 = vpop.f32.mrb[0].mxu0
    %v321 = vpop.f32.mrb[0].mxu0
    %322 = vdwg.mxu0
    %323 = vmatprep.subr.bf16.mxu0 %v118
    %324 = vmatpush1.bf16.msra.mxu0 %v117
    %325 = vmatprep.subr.bf16.mxu0 %v134
    %326 = vmatpush1.bf16.msra.mxu0 %v133
    %327 = vmatprep.subr.bf16.mxu0 %v150
    %328 = vmatpush1.bf16.msra.mxu0 %v149
    %329 = vmatprep.subr.bf16.mxu0 %v166
    %330 = vmatpush1.bf16.msra.mxu0 %v165
    %331 = vmatprep.subr.bf16.mxu0 %v182
    %332 = vmatpush1.bf16.msra.mxu0 %v181
    %333 = vmatprep.subr.bf16.mxu0 %v198
    %334 = vmatpush1.bf16.msra.mxu0 %v197
    %335 = vmatprep.subr.bf16.mxu0 %v214
    %336 = vmatpush1.bf16.msra.mxu0 %v213
    %337 = vmatprep.subr.bf16.mxu0 %v230
    %338 = vmatpush1.bf16.msra.mxu0 %v229
    %339 = vmatprep.subr.bf16.mxu0 0
    %340 = vmatpush1.bf16.msra.mxu0 0
    %341 = vmatprep.subr.bf16.mxu0 0
    %342 = vmatpush1.bf16.msra.mxu0 0
    %343 = vmatprep.subr.bf16.mxu0 0
    %344 = vmatpush1.bf16.msra.mxu0 0
    %345 = vmatprep.subr.bf16.mxu0 0
    %346 = vmatpush1.bf16.msra.mxu0 0
    %347 = vmatprep.subr.bf16.mxu0 0
    %348 = vmatpush1.bf16.msra.mxu0 0
    %349 = vmatprep.subr.bf16.mxu0 0
    %350 = vmatpush1.bf16.msra.mxu0 0
    %351 = vmatprep.subr.bf16.mxu0 0
    %352 = vmatpush1.bf16.msra.mxu0 0
    %353 = vmatprep.subr.bf16.mxu0 0
    %354 = vmatpush1.bf16.msra.mxu0 0
    %355 = vmatprep.mubr.bf16.mxu0 0
    %356 = vmatmul.mubr.bf16.gmra.mrb[0].mxu0 %v48
    %v357 = vpop.f32.mrb[0].mxu0
    %v358 = vadd.f32 0.0, %v357
    %v359 = vpop.f32.mrb[0].mxu0
    %v360 = vadd.f32 0.0, %v359
    %v361 = vpop.f32.mrb[0].mxu0
    %v362 = vpop.f32.mrb[0].mxu0
    %363 = vdwg.mxu0
    %364 = vmatprep.subr.bf16.mxu0 %v120
    %365 = vmatpush1.bf16.msra.mxu0 %v119
    %366 = vmatprep.subr.bf16.mxu0 %v136
    %367 = vmatpush1.bf16.msra.mxu0 %v135
    %368 = vmatprep.subr.bf16.mxu0 %v152
    %369 = vmatpush1.bf16.msra.mxu0 %v151
    %370 = vmatprep.subr.bf16.mxu0 %v168
    %371 = vmatpush1.bf16.msra.mxu0 %v167
    %372 = vmatprep.subr.bf16.mxu0 %v184
    %373 = vmatpush1.bf16.msra.mxu0 %v183
    %374 = vmatprep.subr.bf16.mxu0 %v200
    %375 = vmatpush1.bf16.msra.mxu0 %v199
    %376 = vmatprep.subr.bf16.mxu0 %v216
    %377 = vmatpush1.bf16.msra.mxu0 %v215
    %378 = vmatprep.subr.bf16.mxu0 %v232
    %379 = vmatpush1.bf16.msra.mxu0 %v231
    %380 = vmatprep.subr.bf16.mxu0 0
    %381 = vmatpush1.bf16.msra.mxu0 0
    %382 = vmatprep.subr.bf16.mxu0 0
    %383 = vmatpush1.bf16.msra.mxu0 0
    %384 = vmatprep.subr.bf16.mxu0 0
    %385 = vmatpush1.bf16.msra.mxu0 0
    %386 = vmatprep.subr.bf16.mxu0 0
    %387 = vmatpush1.bf16.msra.mxu0 0
    %388 = vmatprep.subr.bf16.mxu0 0
    %389 = vmatpush1.bf16.msra.mxu0 0
    %390 = vmatprep.subr.bf16.mxu0 0
    %391 = vmatpush1.bf16.msra.mxu0 0
    %392 = vmatprep.subr.bf16.mxu0 0
    %393 = vmatpush1.bf16.msra.mxu0 0
    %394 = vmatprep.subr.bf16.mxu0 0
    %395 = vmatpush1.bf16.msra.mxu0 0
    %396 = vmatprep.mubr.bf16.mxu0 0
    %397 = vmatmul.mubr.bf16.gmra.mrb[0].mxu0 %v48
    %v398 = vpop.f32.mrb[0].mxu0
    %v399 = vadd.f32 0.0, %v398
    %v400 = vpop.f32.mrb[0].mxu0
    %v401 = vadd.f32 0.0, %v400
    %v402 = vpop.f32.mrb[0].mxu0
    %v403 = vpop.f32.mrb[0].mxu0
    %404 = vdwg.mxu0
    %405 = vmatprep.subr.bf16.mxu0 %v122
    %406 = vmatpush1.bf16.msra.mxu0 %v121
    %407 = vmatprep.subr.bf16.mxu0 %v138
    %408 = vmatpush1.bf16.msra.mxu0 %v137
    %409 = vmatprep.subr.bf16.mxu0 %v154
    %410 = vmatpush1.bf16.msra.mxu0 %v153
    %411 = vmatprep.subr.bf16.mxu0 %v170
    %412 = vmatpush1.bf16.msra.mxu0 %v169
    %413 = vmatprep.subr.bf16.mxu0 %v186
    %414 = vmatpush1.bf16.msra.mxu0 %v185
    %415 = vmatprep.subr.bf16.mxu0 %v202
    %416 = vmatpush1.bf16.msra.mxu0 %v201
    %417 = vmatprep.subr.bf16.mxu0 %v218
    %418 = vmatpush1.bf16.msra.mxu0 %v217
    %419 = vmatprep.subr.bf16.mxu0 %v234
    %420 = vmatpush1.bf16.msra.mxu0 %v233
    %421 = vmatprep.subr.bf16.mxu0 0
    %422 = vmatpush1.bf16.msra.mxu0 0
    %423 = vmatprep.subr.bf16.mxu0 0
    %424 = vmatpush1.bf16.msra.mxu0 0
    %425 = vmatprep.subr.bf16.mxu0 0
    %426 = vmatpush1.bf16.msra.mxu0 0
    %427 = vmatprep.subr.bf16.mxu0 0
    %428 = vmatpush1.bf16.msra.mxu0 0
    %429 = vmatprep.subr.bf16.mxu0 0
    %430 = vmatpush1.bf16.msra.mxu0 0
    %431 = vmatprep.subr.bf16.mxu0 0
    %432 = vmatpush1.bf16.msra.mxu0 0
    %433 = vmatprep.subr.bf16.mxu0 0
    %434 = vmatpush1.bf16.msra.mxu0 0
    %435 = vmatprep.subr.bf16.mxu0 0
    %436 = vmatpush1.bf16.msra.mxu0 0
    %437 = vmatprep.mubr.bf16.mxu0 0
    %438 = vmatmul.mubr.bf16.gmra.mrb[0].mxu0 %v48
    %v439 = vpop.f32.mrb[0].mxu0
    %v440 = vadd.f32 0.0, %v439
    %v441 = vpop.f32.mrb[0].mxu0
    %v442 = vadd.f32 0.0, %v441
    %v443 = vpop.f32.mrb[0].mxu0
    %v444 = vpop.f32.mrb[0].mxu0
    %445 = vdwg.mxu0
    %446 = vmatprep.subr.bf16.mxu0 %v124
    %447 = vmatpush1.bf16.msra.mxu0 %v123
    %448 = vmatprep.subr.bf16.mxu0 %v140
    %449 = vmatpush1.bf16.msra.mxu0 %v139
    %450 = vmatprep.subr.bf16.mxu0 %v156
    %451 = vmatpush1.bf16.msra.mxu0 %v155
    %452 = vmatprep.subr.bf16.mxu0 %v172
    %453 = vmatpush1.bf16.msra.mxu0 %v171
    %454 = vmatprep.subr.bf16.mxu0 %v188
    %455 = vmatpush1.bf16.msra.mxu0 %v187
    %456 = vmatprep.subr.bf16.mxu0 %v204
    %457 = vmatpush1.bf16.msra.mxu0 %v203
    %458 = vmatprep.subr.bf16.mxu0 %v220
    %459 = vmatpush1.bf16.msra.mxu0 %v219
    %460 = vmatprep.subr.bf16.mxu0 %v236
    %461 = vmatpush1.bf16.msra.mxu0 %v235
    %462 = vmatprep.subr.bf16.mxu0 0
    %463 = vmatpush1.bf16.msra.mxu0 0
    %464 = vmatprep.subr.bf16.mxu0 0
    %465 = vmatpush1.bf16.msra.mxu0 0
    %466 = vmatprep.subr.bf16.mxu0 0
    %467 = vmatpush1.bf16.msra.mxu0 0
    %468 = vmatprep.subr.bf16.mxu0 0
    %469 = vmatpush1.bf16.msra.mxu0 0
    %470 = vmatprep.subr.bf16.mxu0 0
    %471 = vmatpush1.bf16.msra.mxu0 0
    %472 = vmatprep.subr.bf16.mxu0 0
    %473 = vmatpush1.bf16.msra.mxu0 0
    %474 = vmatprep.subr.bf16.mxu0 0
    %475 = vmatpush1.bf16.msra.mxu0 0
    %476 = vmatprep.subr.bf16.mxu0 0
    %477 = vmatpush1.bf16.msra.mxu0 0
    %478 = vmatprep.mubr.bf16.mxu0 0
    %479 = vmatmul.mubr.bf16.gmra.mrb[0].mxu0 %v48
    %v480 = vpop.f32.mrb[0].mxu0
    %v481 = vadd.f32 0.0, %v480
    %v482 = vpop.f32.mrb[0].mxu0
    %v483 = vadd.f32 0.0, %v482
    %v484 = vpop.f32.mrb[0].mxu0
    %v485 = vpop.f32.mrb[0].mxu0
    %486 = vdwg.mxu0
    %487 = vmatprep.subr.bf16.mxu0 %v126
    %488 = vmatpush1.bf16.msra.mxu0 %v125
    %489 = vmatprep.subr.bf16.mxu0 %v142
    %490 = vmatpush1.bf16.msra.mxu0 %v141
    %491 = vmatprep.subr.bf16.mxu0 %v158
    %492 = vmatpush1.bf16.msra.mxu0 %v157
    %493 = vmatprep.subr.bf16.mxu0 %v174
    %494 = vmatpush1.bf16.msra.mxu0 %v173
    %495 = vmatprep.subr.bf16.mxu0 %v190
    %496 = vmatpush1.bf16.msra.mxu0 %v189
    %497 = vmatprep.subr.bf16.mxu0 %v206
    %498 = vmatpush1.bf16.msra.mxu0 %v205
    %499 = vmatprep.subr.bf16.mxu0 %v222
    %500 = vmatpush1.bf16.msra.mxu0 %v221
    %501 = vmatprep.subr.bf16.mxu0 %v238
    %502 = vmatpush1.bf16.msra.mxu0 %v237
    %503 = vmatprep.subr.bf16.mxu0 0
    %504 = vmatpush1.bf16.msra.mxu0 0
    %505 = vmatprep.subr.bf16.mxu0 0
    %506 = vmatpush1.bf16.msra.mxu0 0
    %507 = vmatprep.subr.bf16.mxu0 0
    %508 = vmatpush1.bf16.msra.mxu0 0
    %509 = vmatprep.subr.bf16.mxu0 0
    %510 = vmatpush1.bf16.msra.mxu0 0
    %511 = vmatprep.subr.bf16.mxu0 0
    %512 = vmatpush1.bf16.msra.mxu0 0
    %513 = vmatprep.subr.bf16.mxu0 0
    %514 = vmatpush1.bf16.msra.mxu0 0
    %515 = vmatprep.subr.bf16.mxu0 0
    %516 = vmatpush1.bf16.msra.mxu0 0
    %517 = vmatprep.subr.bf16.mxu0 0
    %518 = vmatpush1.bf16.msra.mxu0 0
    %519 = vmatprep.mubr.bf16.mxu0 0
    %520 = vmatmul.mubr.bf16.gmra.mrb[0].mxu0 %v48
    %v521 = vpop.f32.mrb[0].mxu0
    %v522 = vadd.f32 0.0, %v521
    %v523 = vpop.f32.mrb[0].mxu0
    %v524 = vadd.f32 0.0, %v523
    %v525 = vpop.f32.mrb[0].mxu0
    %v526 = vpop.f32.mrb[0].mxu0
    %527 = vdwg.mxu0
    %528 = vmatprep.subr.bf16.mxu0 %v128
    %529 = vmatpush1.bf16.msra.mxu0 %v127
    %530 = vmatprep.subr.bf16.mxu0 %v144
    %531 = vmatpush1.bf16.msra.mxu0 %v143
    %532 = vmatprep.subr.bf16.mxu0 %v160
    %533 = vmatpush1.bf16.msra.mxu0 %v159
    %534 = vmatprep.subr.bf16.mxu0 %v176
    %535 = vmatpush1.bf16.msra.mxu0 %v175
    %536 = vmatprep.subr.bf16.mxu0 %v192
    %537 = vmatpush1.bf16.msra.mxu0 %v191
    %538 = vmatprep.subr.bf16.mxu0 %v208
    %539 = vmatpush1.bf16.msra.mxu0 %v207
    %540 = vmatprep.subr.bf16.mxu0 %v224
    %541 = vmatpush1.bf16.msra.mxu0 %v223
    %542 = vmatprep.subr.bf16.mxu0 %v240
    %543 = vmatpush1.bf16.msra.mxu0 %v239
    %544 = vmatprep.subr.bf16.mxu0 0
    %545 = vmatpush1.bf16.msra.mxu0 0
    %546 = vmatprep.subr.bf16.mxu0 0
    %547 = vmatpush1.bf16.msra.mxu0 0
    %548 = vmatprep.subr.bf16.mxu0 0
    %549 = vmatpush1.bf16.msra.mxu0 0
    %550 = vmatprep.subr.bf16.mxu0 0
    %551 = vmatpush1.bf16.msra.mxu0 0
    %552 = vmatprep.subr.bf16.mxu0 0
    %553 = vmatpush1.bf16.msra.mxu0 0
    %554 = vmatprep.subr.bf16.mxu0 0
    %555 = vmatpush1.bf16.msra.mxu0 0
    %556 = vmatprep.subr.bf16.mxu0 0
    %557 = vmatpush1.bf16.msra.mxu0 0
    %558 = vmatprep.subr.bf16.mxu0 0
    %559 = vmatpush1.bf16.msra.mxu0 0
    %560 = vmatprep.mubr.bf16.mxu0 0
    %561 = vmatmul.mubr.bf16.gmra.mrb[0].mxu0 %v48
    %v562 = vpop.f32.mrb[0].mxu0
    %v563 = vadd.f32 0.0, %v562
    %v564 = vpop.f32.mrb[0].mxu0
    %v565 = vadd.f32 0.0, %v564
    %v566 = vpop.f32.mrb[0].mxu0
    %v567 = vpop.f32.mrb[0].mxu0
    %568 = vdwg.mxu0
    %v569 = vld [vmem:[%s2] sm:$0xff]
    %v570 = vld [vmem:[%s2 + $0x8] sm:$0xff]
    %v573 = vlaneseq
    %v574 = vshrl.u32 %v573, 7
    %v575 = vsub.s32 0, %v574
    %v576 = vrot.slane %v569, %v575
    %v577 = vlaneseq
    %v578 = vshrl.u32 %v577, 7
    %v579 = vsub.s32 1, %v578
    %v580 = vrot.slane %v569, %v579
    %v581 = vlaneseq
    %v582 = vshrl.u32 %v581, 7
    %v583 = vsub.s32 2, %v582
    %v584 = vrot.slane %v569, %v583
    %v585 = vlaneseq
    %v586 = vshrl.u32 %v585, 7
    %v587 = vsub.s32 3, %v586
    %v588 = vrot.slane %v569, %v587
    %v589 = vlaneseq
    %v590 = vshrl.u32 %v589, 7
    %v591 = vsub.s32 4, %v590
    %v592 = vrot.slane %v569, %v591
    %v593 = vlaneseq
    %v594 = vshrl.u32 %v593, 7
    %v595 = vsub.s32 5, %v594
    %v596 = vrot.slane %v569, %v595
    %v597 = vlaneseq
    %v598 = vshrl.u32 %v597, 7
    %v599 = vsub.s32 6, %v598
    %v600 = vrot.slane %v569, %v599
    %v601 = vlaneseq
    %v602 = vshrl.u32 %v601, 7
    %v603 = vsub.s32 7, %v602
    %v604 = vrot.slane %v569, %v603
    %v605 = vlaneseq
    %v606 = vshrl.u32 %v605, 7
    %v607 = vsub.s32 0, %v606
    %v608 = vrot.slane %v570, %v607
    %v609 = vlaneseq
    %v610 = vshrl.u32 %v609, 7
    %v611 = vsub.s32 1, %v610
    %v612 = vrot.slane %v570, %v611
    %v613 = vlaneseq
    %v614 = vshrl.u32 %v613, 7
    %v615 = vsub.s32 2, %v614
    %v616 = vrot.slane %v570, %v615
    %v617 = vlaneseq
    %v618 = vshrl.u32 %v617, 7
    %v619 = vsub.s32 3, %v618
    %v620 = vrot.slane %v570, %v619
    %v621 = vlaneseq
    %v622 = vshrl.u32 %v621, 7
    %v623 = vsub.s32 4, %v622
    %v624 = vrot.slane %v570, %v623
    %v625 = vlaneseq
    %v626 = vshrl.u32 %v625, 7
    %v627 = vsub.s32 5, %v626
    %v628 = vrot.slane %v570, %v627
    %v629 = vlaneseq
    %v630 = vshrl.u32 %v629, 7
    %v631 = vsub.s32 6, %v630
    %v632 = vrot.slane %v570, %v631
    %v633 = vlaneseq
    %v634 = vshrl.u32 %v633, 7
    %v635 = vsub.s32 7, %v634
    %v636 = vrot.slane %v570, %v635
    %v653 = vmul.f32 %v276, %v576
    %v654 = vmul.f32 %v278, %v580
    %v655 = vmul.f32 %v317, %v584
    %v656 = vmul.f32 %v319, %v588
    %v657 = vmul.f32 %v358, %v592
    %v658 = vmul.f32 %v360, %v596
    %v659 = vmul.f32 %v399, %v600
    %v660 = vmul.f32 %v401, %v604
    %v661 = vmul.f32 %v440, %v608
    %v662 = vmul.f32 %v442, %v612
    %v663 = vmul.f32 %v481, %v616
    %v664 = vmul.f32 %v483, %v620
    %v665 = vmul.f32 %v522, %v624
    %v666 = vmul.f32 %v524, %v628
    %v667 = vmul.f32 %v563, %v632
    %v668 = vmul.f32 %v565, %v636
    %v669 = vld [vmem:[%s3] sm:$0xff]
    %v670 = vld [vmem:[%s3 + $0x8] sm:$0xff]
    %v673 = vlaneseq
    %v674 = vshrl.u32 %v673, 7
    %v675 = vsub.s32 0, %v674
    %v676 = vrot.slane %v669, %v675
    %v677 = vlaneseq
    %v678 = vshrl.u32 %v677, 7
    %v679 = vsub.s32 1, %v678
    %v680 = vrot.slane %v669, %v679
    %v681 = vlaneseq
    %v682 = vshrl.u32 %v681, 7
    %v683 = vsub.s32 2, %v682
    %v684 = vrot.slane %v669, %v683
    %v685 = vlaneseq
    %v686 = vshrl.u32 %v685, 7
    %v687 = vsub.s32 3, %v686
    %v688 = vrot.slane %v669, %v687
    %v689 = vlaneseq
    %v690 = vshrl.u32 %v689, 7
    %v691 = vsub.s32 4, %v690
    %v692 = vrot.slane %v669, %v691
    %v693 = vlaneseq
    %v694 = vshrl.u32 %v693, 7
    %v695 = vsub.s32 5, %v694
    %v696 = vrot.slane %v669, %v695
    %v697 = vlaneseq
    %v698 = vshrl.u32 %v697, 7
    %v699 = vsub.s32 6, %v698
    %v700 = vrot.slane %v669, %v699
    %v701 = vlaneseq
    %v702 = vshrl.u32 %v701, 7
    %v703 = vsub.s32 7, %v702
    %v704 = vrot.slane %v669, %v703
    %v705 = vlaneseq
    %v706 = vshrl.u32 %v705, 7
    %v707 = vsub.s32 0, %v706
    %v708 = vrot.slane %v670, %v707
    %v709 = vlaneseq
    %v710 = vshrl.u32 %v709, 7
    %v711 = vsub.s32 1, %v710
    %v712 = vrot.slane %v670, %v711
    %v713 = vlaneseq
    %v714 = vshrl.u32 %v713, 7
    %v715 = vsub.s32 2, %v714
    %v716 = vrot.slane %v670, %v715
    %v717 = vlaneseq
    %v718 = vshrl.u32 %v717, 7
    %v719 = vsub.s32 3, %v718
    %v720 = vrot.slane %v670, %v719
    %v721 = vlaneseq
    %v722 = vshrl.u32 %v721, 7
    %v723 = vsub.s32 4, %v722
    %v724 = vrot.slane %v670, %v723
    %v725 = vlaneseq
    %v726 = vshrl.u32 %v725, 7
    %v727 = vsub.s32 5, %v726
    %v728 = vrot.slane %v670, %v727
    %v729 = vlaneseq
    %v730 = vshrl.u32 %v729, 7
    %v731 = vsub.s32 6, %v730
    %v732 = vrot.slane %v670, %v731
    %v733 = vlaneseq
    %v734 = vshrl.u32 %v733, 7
    %v735 = vsub.s32 7, %v734
    %v736 = vrot.slane %v670, %v735
    %v753 = vadd.f32 %v653, %v676
    %v754 = vadd.f32 %v654, %v680
    %v755 = vadd.f32 %v655, %v684
    %v756 = vadd.f32 %v656, %v688
    %v757 = vadd.f32 %v657, %v692
    %v758 = vadd.f32 %v658, %v696
    %v759 = vadd.f32 %v659, %v700
    %v760 = vadd.f32 %v660, %v704
    %v761 = vadd.f32 %v661, %v708
    %v762 = vadd.f32 %v662, %v712
    %v763 = vadd.f32 %v663, %v716
    %v764 = vadd.f32 %v664, %v720
    %v765 = vadd.f32 %v665, %v724
    %v766 = vadd.f32 %v666, %v728
    %v767 = vadd.f32 %v667, %v732
    %v768 = vadd.f32 %v668, %v736
    %v769 = vmax.f32 %v753, 0.0
    %v770 = vmax.f32 %v754, 0.0
    %v771 = vmax.f32 %v755, 0.0
    %v772 = vmax.f32 %v756, 0.0
    %v773 = vmax.f32 %v757, 0.0
    %v774 = vmax.f32 %v758, 0.0
    %v775 = vmax.f32 %v759, 0.0
    %v776 = vmax.f32 %v760, 0.0
    %v777 = vmax.f32 %v761, 0.0
    %v778 = vmax.f32 %v762, 0.0
    %v779 = vmax.f32 %v763, 0.0
    %v780 = vmax.f32 %v764, 0.0
    %v781 = vmax.f32 %v765, 0.0
    %v782 = vmax.f32 %v766, 0.0
    %v783 = vmax.f32 %v767, 0.0
    %v784 = vmax.f32 %v768, 0.0
    %v785 = vpack.c.bf16 %v769, %v769
    %v786 = vpack.c.bf16 %v770, %v770
    %v787 = vpack.c.bf16 %v771, %v771
    %v788 = vpack.c.bf16 %v772, %v772
    %v789 = vpack.c.bf16 %v773, %v773
    %v790 = vpack.c.bf16 %v774, %v774
    %v791 = vpack.c.bf16 %v775, %v775
    %v792 = vpack.c.bf16 %v776, %v776
    %v793 = vpack.c.bf16 %v777, %v777
    %v794 = vpack.c.bf16 %v778, %v778
    %v795 = vpack.c.bf16 %v779, %v779
    %v796 = vpack.c.bf16 %v780, %v780
    %v797 = vpack.c.bf16 %v781, %v781
    %v798 = vpack.c.bf16 %v782, %v782
    %v799 = vpack.c.bf16 %v783, %v783
    %v800 = vpack.c.bf16 %v784, %v784
    %v801 = vld [vmem:[#allocation2] sm:$0xff]
    %v802 = vld [vmem:[#allocation2 + $0x8] sm:$0xff]
    %v803 = vld [vmem:[#allocation2 + $0x10] sm:$0xff]
    %v804 = vld [vmem:[#allocation2 + $0x18] sm:$0xff]
    %v805 = vld [vmem:[#allocation2 + $0x20] sm:$0xff]
    %v806 = vld [vmem:[#allocation2 + $0x28] sm:$0xff]
    %v807 = vld [vmem:[#allocation2 + $0x30] sm:$0xff]
    %v808 = vld [vmem:[#allocation2 + $0x38] sm:$0xff]
    %v809 = vld [vmem:[#allocation2 + $0x40] sm:$0xff]
    %v810 = vld [vmem:[#allocation2 + $0x48] sm:$0xff]
    %v811 = vld [vmem:[#allocation2 + $0x50] sm:$0xff]
    %v812 = vld [vmem:[#allocation2 + $0x58] sm:$0xff]
    %v813 = vld [vmem:[#allocation2 + $0x60] sm:$0xff]
    %v814 = vld [vmem:[#allocation2 + $0x68] sm:$0xff]
    %v815 = vld [vmem:[#allocation2 + $0x70] sm:$0xff]
    %v816 = vld [vmem:[#allocation2 + $0x78] sm:$0xff]
    %v817 = vld [vmem:[#allocation2 + $0x80] sm:$0xff]
    %v818 = vld [vmem:[#allocation2 + $0x88] sm:$0xff]
    %v819 = vld [vmem:[#allocation2 + $0x90] sm:$0xff]
    %v820 = vld [vmem:[#allocation2 + $0x98] sm:$0xff]
    %v821 = vld [vmem:[#allocation2 + $0xa0] sm:$0xff]
    %v822 = vld [vmem:[#allocation2 + $0xa8] sm:$0xff]
    %v823 = vld [vmem:[#allocation2 + $0xb0] sm:$0xff]
    %v824 = vld [vmem:[#allocation2 + $0xb8] sm:$0xff]
    %v825 = vld [vmem:[#allocation2 + $0xc0] sm:$0xff]
    %v826 = vld [vmem:[#allocation2 + $0xc8] sm:$0xff]
    %v827 = vld [vmem:[#allocation2 + $0xd0] sm:$0xff]
    %v828 = vld [vmem:[#allocation2 + $0xd8] sm:$0xff]
    %v829 = vld [vmem:[#allocation2 + $0xe0] sm:$0xff]
    %v830 = vld [vmem:[#allocation2 + $0xe8] sm:$0xff]
    %v831 = vld [vmem:[#allocation2 + $0xf0] sm:$0xff]
    %v832 = vld [vmem:[#allocation2 + $0xf8] sm:$0xff]
    %v833 = vld [vmem:[#allocation2 + $0x100] sm:$0xff]
    %v834 = vld [vmem:[#allocation2 + $0x108] sm:$0xff]
    %v835 = vld [vmem:[#allocation2 + $0x110] sm:$0xff]
    %v836 = vld [vmem:[#allocation2 + $0x118] sm:$0xff]
    %v837 = vld [vmem:[#allocation2 + $0x120] sm:$0xff]
    %v838 = vld [vmem:[#allocation2 + $0x128] sm:$0xff]
    %v839 = vld [vmem:[#allocation2 + $0x130] sm:$0xff]
    %v840 = vld [vmem:[#allocation2 + $0x138] sm:$0xff]
    %v841 = vld [vmem:[#allocation2 + $0x140] sm:$0xff]
    %v842 = vld [vmem:[#allocation2 + $0x148] sm:$0xff]
    %v843 = vld [vmem:[#allocation2 + $0x150] sm:$0xff]
    %v844 = vld [vmem:[#allocation2 + $0x158] sm:$0xff]
    %v845 = vld [vmem:[#allocation2 + $0x160] sm:$0xff]
    %v846 = vld [vmem:[#allocation2 + $0x168] sm:$0xff]
    %v847 = vld [vmem:[#allocation2 + $0x170] sm:$0xff]
    %v848 = vld [vmem:[#allocation2 + $0x178] sm:$0xff]
    %v849 = vld [vmem:[#allocation2 + $0x180] sm:$0xff]
    %v850 = vld [vmem:[#allocation2 + $0x188] sm:$0xff]
    %v851 = vld [vmem:[#allocation2 + $0x190] sm:$0xff]
    %v852 = vld [vmem:[#allocation2 + $0x198] sm:$0xff]
    %v853 = vld [vmem:[#allocation2 + $0x1a0] sm:$0xff]
    %v854 = vld [vmem:[#allocation2 + $0x1a8] sm:$0xff]
    %v855 = vld [vmem:[#allocation2 + $0x1b0] sm:$0xff]
    %v856 = vld [vmem:[#allocation2 + $0x1b8] sm:$0xff]
    %v857 = vld [vmem:[#allocation2 + $0x1c0] sm:$0xff]
    %v858 = vld [vmem:[#allocation2 + $0x1c8] sm:$0xff]
    %v859 = vld [vmem:[#allocation2 + $0x1d0] sm:$0xff]
    %v860 = vld [vmem:[#allocation2 + $0x1d8] sm:$0xff]
    %v861 = vld [vmem:[#allocation2 + $0x1e0] sm:$0xff]
    %v862 = vld [vmem:[#allocation2 + $0x1e8] sm:$0xff]
    %v863 = vld [vmem:[#allocation2 + $0x1f0] sm:$0xff]
    %v864 = vld [vmem:[#allocation2 + $0x1f8] sm:$0xff]
    %v865 = vld [vmem:[#allocation2 + $0x200] sm:$0xff]
    %v866 = vld [vmem:[#allocation2 + $0x208] sm:$0xff]
    %v867 = vld [vmem:[#allocation2 + $0x210] sm:$0xff]
    %v868 = vld [vmem:[#allocation2 + $0x218] sm:$0xff]
    %v869 = vld [vmem:[#allocation2 + $0x220] sm:$0xff]
    %v870 = vld [vmem:[#allocation2 + $0x228] sm:$0xff]
    %v871 = vld [vmem:[#allocation2 + $0x230] sm:$0xff]
    %v872 = vld [vmem:[#allocation2 + $0x238] sm:$0xff]
    %v873 = vld [vmem:[#allocation2 + $0x240] sm:$0xff]
    %v874 = vld [vmem:[#allocation2 + $0x248] sm:$0xff]
    %v875 = vld [vmem:[#allocation2 + $0x250] sm:$0xff]
    %v876 = vld [vmem:[#allocation2 + $0x258] sm:$0xff]
    %v877 = vld [vmem:[#allocation2 + $0x260] sm:$0xff]
    %v878 = vld [vmem:[#allocation2 + $0x268] sm:$0xff]
    %v879 = vld [vmem:[#allocation2 + $0x270] sm:$0xff]
    %v880 = vld [vmem:[#allocation2 + $0x278] sm:$0xff]
    %v881 = vld [vmem:[#allocation2 + $0x280] sm:$0xff]
    %v882 = vld [vmem:[#allocation2 + $0x288] sm:$0xff]
    %v883 = vld [vmem:[#allocation2 + $0x290] sm:$0xff]
    %v884 = vld [vmem:[#allocation2 + $0x298] sm:$0xff]
    %v885 = vld [vmem:[#allocation2 + $0x2a0] sm:$0xff]
    %v886 = vld [vmem:[#allocation2 + $0x2a8] sm:$0xff]
    %v887 = vld [vmem:[#allocation2 + $0x2b0] sm:$0xff]
    %v888 = vld [vmem:[#allocation2 + $0x2b8] sm:$0xff]
    %v889 = vld [vmem:[#allocation2 + $0x2c0] sm:$0xff]
    %v890 = vld [vmem:[#allocation2 + $0x2c8] sm:$0xff]
    %v891 = vld [vmem:[#allocation2 + $0x2d0] sm:$0xff]
    %v892 = vld [vmem:[#allocation2 + $0x2d8] sm:$0xff]
    %v893 = vld [vmem:[#allocation2 + $0x2e0] sm:$0xff]
    %v894 = vld [vmem:[#allocation2 + $0x2e8] sm:$0xff]
    %v895 = vld [vmem:[#allocation2 + $0x2f0] sm:$0xff]
    %v896 = vld [vmem:[#allocation2 + $0x2f8] sm:$0xff]
    %v897 = vld [vmem:[#allocation2 + $0x300] sm:$0xff]
    %v898 = vld [vmem:[#allocation2 + $0x308] sm:$0xff]
    %v899 = vld [vmem:[#allocation2 + $0x310] sm:$0xff]
    %v900 = vld [vmem:[#allocation2 + $0x318] sm:$0xff]
    %v901 = vld [vmem:[#allocation2 + $0x320] sm:$0xff]
    %v902 = vld [vmem:[#allocation2 + $0x328] sm:$0xff]
    %v903 = vld [vmem:[#allocation2 + $0x330] sm:$0xff]
    %v904 = vld [vmem:[#allocation2 + $0x338] sm:$0xff]
    %v905 = vld [vmem:[#allocation2 + $0x340] sm:$0xff]
    %v906 = vld [vmem:[#allocation2 + $0x348] sm:$0xff]
    %v907 = vld [vmem:[#allocation2 + $0x350] sm:$0xff]
    %v908 = vld [vmem:[#allocation2 + $0x358] sm:$0xff]
    %v909 = vld [vmem:[#allocation2 + $0x360] sm:$0xff]
    %v910 = vld [vmem:[#allocation2 + $0x368] sm:$0xff]
    %v911 = vld [vmem:[#allocation2 + $0x370] sm:$0xff]
    %v912 = vld [vmem:[#allocation2 + $0x378] sm:$0xff]
    %v913 = vld [vmem:[#allocation2 + $0x380] sm:$0xff]
    %v914 = vld [vmem:[#allocation2 + $0x388] sm:$0xff]
    %v915 = vld [vmem:[#allocation2 + $0x390] sm:$0xff]
    %v916 = vld [vmem:[#allocation2 + $0x398] sm:$0xff]
    %v917 = vld [vmem:[#allocation2 + $0x3a0] sm:$0xff]
    %v918 = vld [vmem:[#allocation2 + $0x3a8] sm:$0xff]
    %v919 = vld [vmem:[#allocation2 + $0x3b0] sm:$0xff]
    %v920 = vld [vmem:[#allocation2 + $0x3b8] sm:$0xff]
    %v921 = vld [vmem:[#allocation2 + $0x3c0] sm:$0xff]
    %v922 = vld [vmem:[#allocation2 + $0x3c8] sm:$0xff]
    %v923 = vld [vmem:[#allocation2 + $0x3d0] sm:$0xff]
    %v924 = vld [vmem:[#allocation2 + $0x3d8] sm:$0xff]
    %v925 = vld [vmem:[#allocation2 + $0x3e0] sm:$0xff]
    %v926 = vld [vmem:[#allocation2 + $0x3e8] sm:$0xff]
    %v927 = vld [vmem:[#allocation2 + $0x3f0] sm:$0xff]
    %v928 = vld [vmem:[#allocation2 + $0x3f8] sm:$0xff]
    %v929 = vld [vmem:[#allocation2 + $0x400] sm:$0xff]
    %v930 = vld [vmem:[#allocation2 + $0x408] sm:$0xff]
    %v931 = vld [vmem:[#allocation2 + $0x410] sm:$0xff]
    %v932 = vld [vmem:[#allocation2 + $0x418] sm:$0xff]
    %v933 = vld [vmem:[#allocation2 + $0x420] sm:$0xff]
    %v934 = vld [vmem:[#allocation2 + $0x428] sm:$0xff]
    %v935 = vld [vmem:[#allocation2 + $0x430] sm:$0xff]
    %v936 = vld [vmem:[#allocation2 + $0x438] sm:$0xff]
    %v937 = vld [vmem:[#allocation2 + $0x440] sm:$0xff]
    %v938 = vld [vmem:[#allocation2 + $0x448] sm:$0xff]
    %v939 = vld [vmem:[#allocation2 + $0x450] sm:$0xff]
    %v940 = vld [vmem:[#allocation2 + $0x458] sm:$0xff]
    %v941 = vld [vmem:[#allocation2 + $0x460] sm:$0xff]
    %v942 = vld [vmem:[#allocation2 + $0x468] sm:$0xff]
    %v943 = vld [vmem:[#allocation2 + $0x470] sm:$0xff]
    %v944 = vld [vmem:[#allocation2 + $0x478] sm:$0xff]
    %v945 = vld [vmem:[#allocation2 + $0x480] sm:$0xff]
    %v946 = vld [vmem:[#allocation2 + $0x488] sm:$0xff]
    %v947 = vld [vmem:[#allocation2 + $0x490] sm:$0xff]
    %v948 = vld [vmem:[#allocation2 + $0x498] sm:$0xff]
    %v949 = vld [vmem:[#allocation2 + $0x4a0] sm:$0xff]
    %v950 = vld [vmem:[#allocation2 + $0x4a8] sm:$0xff]
    %v951 = vld [vmem:[#allocation2 + $0x4b0] sm:$0xff]
    %v952 = vld [vmem:[#allocation2 + $0x4b8] sm:$0xff]
    %v953 = vld [vmem:[#allocation2 + $0x4c0] sm:$0xff]
    %v954 = vld [vmem:[#allocation2 + $0x4c8] sm:$0xff]
    %v955 = vld [vmem:[#allocation2 + $0x4d0] sm:$0xff]
    %v956 = vld [vmem:[#allocation2 + $0x4d8] sm:$0xff]
    %v957 = vld [vmem:[#allocation2 + $0x4e0] sm:$0xff]
    %v958 = vld [vmem:[#allocation2 + $0x4e8] sm:$0xff]
    %v959 = vld [vmem:[#allocation2 + $0x4f0] sm:$0xff]
    %v960 = vld [vmem:[#allocation2 + $0x4f8] sm:$0xff]
    %v961 = vld [vmem:[#allocation2 + $0x500] sm:$0xff]
    %v962 = vld [vmem:[#allocation2 + $0x508] sm:$0xff]
    %v963 = vld [vmem:[#allocation2 + $0x510] sm:$0xff]
    %v964 = vld [vmem:[#allocation2 + $0x518] sm:$0xff]
    %v965 = vld [vmem:[#allocation2 + $0x520] sm:$0xff]
    %v966 = vld [vmem:[#allocation2 + $0x528] sm:$0xff]
    %v967 = vld [vmem:[#allocation2 + $0x530] sm:$0xff]
    %v968 = vld [vmem:[#allocation2 + $0x538] sm:$0xff]
    %v969 = vld [vmem:[#allocation2 + $0x540] sm:$0xff]
    %v970 = vld [vmem:[#allocation2 + $0x548] sm:$0xff]
    %v971 = vld [vmem:[#allocation2 + $0x550] sm:$0xff]
    %v972 = vld [vmem:[#allocation2 + $0x558] sm:$0xff]
    %v973 = vld [vmem:[#allocation2 + $0x560] sm:$0xff]
    %v974 = vld [vmem:[#allocation2 + $0x568] sm:$0xff]
    %v975 = vld [vmem:[#allocation2 + $0x570] sm:$0xff]
    %v976 = vld [vmem:[#allocation2 + $0x578] sm:$0xff]
    %v977 = vld [vmem:[#allocation2 + $0x580] sm:$0xff]
    %v978 = vld [vmem:[#allocation2 + $0x588] sm:$0xff]
    %v979 = vld [vmem:[#allocation2 + $0x590] sm:$0xff]
    %v980 = vld [vmem:[#allocation2 + $0x598] sm:$0xff]
    %v981 = vld [vmem:[#allocation2 + $0x5a0] sm:$0xff]
    %v982 = vld [vmem:[#allocation2 + $0x5a8] sm:$0xff]
    %v983 = vld [vmem:[#allocation2 + $0x5b0] sm:$0xff]
    %v984 = vld [vmem:[#allocation2 + $0x5b8] sm:$0xff]
    %v985 = vld [vmem:[#allocation2 + $0x5c0] sm:$0xff]
    %v986 = vld [vmem:[#allocation2 + $0x5c8] sm:$0xff]
    %v987 = vld [vmem:[#allocation2 + $0x5d0] sm:$0xff]
    %v988 = vld [vmem:[#allocation2 + $0x5d8] sm:$0xff]
    %v989 = vld [vmem:[#allocation2 + $0x5e0] sm:$0xff]
    %v990 = vld [vmem:[#allocation2 + $0x5e8] sm:$0xff]
    %v991 = vld [vmem:[#allocation2 + $0x5f0] sm:$0xff]
    %v992 = vld [vmem:[#allocation2 + $0x5f8] sm:$0xff]
    %v993 = vld [vmem:[#allocation2 + $0x600] sm:$0xff]
    %v994 = vld [vmem:[#allocation2 + $0x608] sm:$0xff]
    %v995 = vld [vmem:[#allocation2 + $0x610] sm:$0xff]
    %v996 = vld [vmem:[#allocation2 + $0x618] sm:$0xff]
    %v997 = vld [vmem:[#allocation2 + $0x620] sm:$0xff]
    %v998 = vld [vmem:[#allocation2 + $0x628] sm:$0xff]
    %v999 = vld [vmem:[#allocation2 + $0x630] sm:$0xff]
    %v1000 = vld [vmem:[#allocation2 + $0x638] sm:$0xff]
    %v1001 = vld [vmem:[#allocation2 + $0x640] sm:$0xff]
    %v1002 = vld [vmem:[#allocation2 + $0x648] sm:$0xff]
    %v1003 = vld [vmem:[#allocation2 + $0x650] sm:$0xff]
    %v1004 = vld [vmem:[#allocation2 + $0x658] sm:$0xff]
    %v1005 = vld [vmem:[#allocation2 + $0x660] sm:$0xff]
    %v1006 = vld [vmem:[#allocation2 + $0x668] sm:$0xff]
    %v1007 = vld [vmem:[#allocation2 + $0x670] sm:$0xff]
    %v1008 = vld [vmem:[#allocation2 + $0x678] sm:$0xff]
    %v1009 = vld [vmem:[#allocation2 + $0x680] sm:$0xff]
    %v1010 = vld [vmem:[#allocation2 + $0x688] sm:$0xff]
    %v1011 = vld [vmem:[#allocation2 + $0x690] sm:$0xff]
    %v1012 = vld [vmem:[#allocation2 + $0x698] sm:$0xff]
    %v1013 = vld [vmem:[#allocation2 + $0x6a0] sm:$0xff]
    %v1014 = vld [vmem:[#allocation2 + $0x6a8] sm:$0xff]
    %v1015 = vld [vmem:[#allocation2 + $0x6b0] sm:$0xff]
    %v1016 = vld [vmem:[#allocation2 + $0x6b8] sm:$0xff]
    %v1017 = vld [vmem:[#allocation2 + $0x6c0] sm:$0xff]
    %v1018 = vld [vmem:[#allocation2 + $0x6c8] sm:$0xff]
    %v1019 = vld [vmem:[#allocation2 + $0x6d0] sm:$0xff]
    %v1020 = vld [vmem:[#allocation2 + $0x6d8] sm:$0xff]
    %v1021 = vld [vmem:[#allocation2 + $0x6e0] sm:$0xff]
    %v1022 = vld [vmem:[#allocation2 + $0x6e8] sm:$0xff]
    %v1023 = vld [vmem:[#allocation2 + $0x6f0] sm:$0xff]
    %v1024 = vld [vmem:[#allocation2 + $0x6f8] sm:$0xff]
    %v1025 = vld [vmem:[#allocation2 + $0x700] sm:$0xff]
    %v1026 = vld [vmem:[#allocation2 + $0x708] sm:$0xff]
    %v1027 = vld [vmem:[#allocation2 + $0x710] sm:$0xff]
    %v1028 = vld [vmem:[#allocation2 + $0x718] sm:$0xff]
    %v1029 = vld [vmem:[#allocation2 + $0x720] sm:$0xff]
    %v1030 = vld [vmem:[#allocation2 + $0x728] sm:$0xff]
    %v1031 = vld [vmem:[#allocation2 + $0x730] sm:$0xff]
    %v1032 = vld [vmem:[#allocation2 + $0x738] sm:$0xff]
    %v1033 = vld [vmem:[#allocation2 + $0x740] sm:$0xff]
    %v1034 = vld [vmem:[#allocation2 + $0x748] sm:$0xff]
    %v1035 = vld [vmem:[#allocation2 + $0x750] sm:$0xff]
    %v1036 = vld [vmem:[#allocation2 + $0x758] sm:$0xff]
    %v1037 = vld [vmem:[#allocation2 + $0x760] sm:$0xff]
    %v1038 = vld [vmem:[#allocation2 + $0x768] sm:$0xff]
    %v1039 = vld [vmem:[#allocation2 + $0x770] sm:$0xff]
    %v1040 = vld [vmem:[#allocation2 + $0x778] sm:$0xff]
    %v1041 = vld [vmem:[#allocation2 + $0x780] sm:$0xff]
    %v1042 = vld [vmem:[#allocation2 + $0x788] sm:$0xff]
    %v1043 = vld [vmem:[#allocation2 + $0x790] sm:$0xff]
    %v1044 = vld [vmem:[#allocation2 + $0x798] sm:$0xff]
    %v1045 = vld [vmem:[#allocation2 + $0x7a0] sm:$0xff]
    %v1046 = vld [vmem:[#allocation2 + $0x7a8] sm:$0xff]
    %v1047 = vld [vmem:[#allocation2 + $0x7b0] sm:$0xff]
    %v1048 = vld [vmem:[#allocation2 + $0x7b8] sm:$0xff]
    %v1049 = vld [vmem:[#allocation2 + $0x7c0] sm:$0xff]
    %v1050 = vld [vmem:[#allocation2 + $0x7c8] sm:$0xff]
    %v1051 = vld [vmem:[#allocation2 + $0x7d0] sm:$0xff]
    %v1052 = vld [vmem:[#allocation2 + $0x7d8] sm:$0xff]
    %v1053 = vld [vmem:[#allocation2 + $0x7e0] sm:$0xff]
    %v1054 = vld [vmem:[#allocation2 + $0x7e8] sm:$0xff]
    %v1055 = vld [vmem:[#allocation2 + $0x7f0] sm:$0xff]
    %v1056 = vld [vmem:[#allocation2 + $0x7f8] sm:$0xff]
    %v1057 = vunpack.c.l.s8.bf16 %v801
    %v1058 = vunpack.c.l.s8.bf16 %v802
    %v1059 = vunpack.c.l.s8.bf16 %v803
    %v1060 = vunpack.c.l.s8.bf16 %v804
    %v1061 = vunpack.c.h.s8.bf16 %v801
    %v1062 = vunpack.c.h.s8.bf16 %v802
    %v1063 = vunpack.c.h.s8.bf16 %v803
    %v1064 = vunpack.c.h.s8.bf16 %v804
    %v1065 = vunpack.c.l.s8.bf16 %v805
    %v1066 = vunpack.c.l.s8.bf16 %v806
    %v1067 = vunpack.c.l.s8.bf16 %v807
    %v1068 = vunpack.c.l.s8.bf16 %v808
    %v1069 = vunpack.c.h.s8.bf16 %v805
    %v1070 = vunpack.c.h.s8.bf16 %v806
    %v1071 = vunpack.c.h.s8.bf16 %v807
    %v1072 = vunpack.c.h.s8.bf16 %v808
    %v1073 = vunpack.c.l.s8.bf16 %v809
    %v1074 = vunpack.c.l.s8.bf16 %v810
    %v1075 = vunpack.c.l.s8.bf16 %v811
    %v1076 = vunpack.c.l.s8.bf16 %v812
    %v1077 = vunpack.c.h.s8.bf16 %v809
    %v1078 = vunpack.c.h.s8.bf16 %v810
    %v1079 = vunpack.c.h.s8.bf16 %v811
    %v1080 = vunpack.c.h.s8.bf16 %v812
    %v1081 = vunpack.c.l.s8.bf16 %v813
    %v1082 = vunpack.c.l.s8.bf16 %v814
    %v1083 = vunpack.c.l.s8.bf16 %v815
    %v1084 = vunpack.c.l.s8.bf16 %v816
    %v1085 = vunpack.c.h.s8.bf16 %v813
    %v1086 = vunpack.c.h.s8.bf16 %v814
    %v1087 = vunpack.c.h.s8.bf16 %v815
    %v1088 = vunpack.c.h.s8.bf16 %v816
    %v1089 = vunpack.c.l.s8.bf16 %v817
    %v1090 = vunpack.c.l.s8.bf16 %v818
    %v1091 = vunpack.c.l.s8.bf16 %v819
    %v1092 = vunpack.c.l.s8.bf16 %v820
    %v1093 = vunpack.c.h.s8.bf16 %v817
    %v1094 = vunpack.c.h.s8.bf16 %v818
    %v1095 = vunpack.c.h.s8.bf16 %v819
    %v1096 = vunpack.c.h.s8.bf16 %v820
    %v1097 = vunpack.c.l.s8.bf16 %v821
    %v1098 = vunpack.c.l.s8.bf16 %v822
    %v1099 = vunpack.c.l.s8.bf16 %v823
    %v1100 = vunpack.c.l.s8.bf16 %v824
    %v1101 = vunpack.c.h.s8.bf16 %v821
    %v1102 = vunpack.c.h.s8.bf16 %v822
    %v1103 = vunpack.c.h.s8.bf16 %v823
    %v1104 = vunpack.c.h.s8.bf16 %v824
    %v1105 = vunpack.c.l.s8.bf16 %v825
    %v1106 = vunpack.c.l.s8.bf16 %v826
    %v1107 = vunpack.c.l.s8.bf16 %v827
    %v1108 = vunpack.c.l.s8.bf16 %v828
    %v1109 = vunpack.c.h.s8.bf16 %v825
    %v1110 = vunpack.c.h.s8.bf16 %v826
    %v1111 = vunpack.c.h.s8.bf16 %v827
    %v1112 = vunpack.c.h.s8.bf16 %v828
    %v1113 = vunpack.c.l.s8.bf16 %v829
    %v1114 = vunpack.c.l.s8.bf16 %v830
    %v1115 = vunpack.c.l.s8.bf16 %v831
    %v1116 = vunpack.c.l.s8.bf16 %v832
    %v1117 = vunpack.c.h.s8.bf16 %v829
    %v1118 = vunpack.c.h.s8.bf16 %v830
    %v1119 = vunpack.c.h.s8.bf16 %v831
    %v1120 = vunpack.c.h.s8.bf16 %v832
    %v1121 = vunpack.c.l.s8.bf16 %v833
    %v1122 = vunpack.c.l.s8.bf16 %v834
    %v1123 = vunpack.c.l.s8.bf16 %v835
    %v1124 = vunpack.c.l.s8.bf16 %v836
    %v1125 = vunpack.c.h.s8.bf16 %v833
    %v1126 = vunpack.c.h.s8.bf16 %v834
    %v1127 = vunpack.c.h.s8.bf16 %v835
    %v1128 = vunpack.c.h.s8.bf16 %v836
    %v1129 = vunpack.c.l.s8.bf16 %v837
    %v1130 = vunpack.c.l.s8.bf16 %v838
    %v1131 = vunpack.c.l.s8.bf16 %v839
    %v1132 = vunpack.c.l.s8.bf16 %v840
    %v1133 = vunpack.c.h.s8.bf16 %v837
    %v1134 = vunpack.c.h.s8.bf16 %v838
    %v1135 = vunpack.c.h.s8.bf16 %v839
    %v1136 = vunpack.c.h.s8.bf16 %v840
    %v1137 = vunpack.c.l.s8.bf16 %v841
    %v1138 = vunpack.c.l.s8.bf16 %v842
    %v1139 = vunpack.c.l.s8.bf16 %v843
    %v1140 = vunpack.c.l.s8.bf16 %v844
    %v1141 = vunpack.c.h.s8.bf16 %v841
    %v1142 = vunpack.c.h.s8.bf16 %v842
    %v1143 = vunpack.c.h.s8.bf16 %v843
    %v1144 = vunpack.c.h.s8.bf16 %v844
    %v1145 = vunpack.c.l.s8.bf16 %v845
    %v1146 = vunpack.c.l.s8.bf16 %v846
    %v1147 = vunpack.c.l.s8.bf16 %v847
    %v1148 = vunpack.c.l.s8.bf16 %v848
    %v1149 = vunpack.c.h.s8.bf16 %v845
    %v1150 = vunpack.c.h.s8.bf16 %v846
    %v1151 = vunpack.c.h.s8.bf16 %v847
    %v1152 = vunpack.c.h.s8.bf16 %v848
    %v1153 = vunpack.c.l.s8.bf16 %v849
    %v1154 = vunpack.c.l.s8.bf16 %v850
    %v1155 = vunpack.c.l.s8.bf16 %v851
    %v1156 = vunpack.c.l.s8.bf16 %v852
    %v1157 = vunpack.c.h.s8.bf16 %v849
    %v1158 = vunpack.c.h.s8.bf16 %v850
    %v1159 = vunpack.c.h.s8.bf16 %v851
    %v1160 = vunpack.c.h.s8.bf16 %v852
    %v1161 = vunpack.c.l.s8.bf16 %v853
    %v1162 = vunpack.c.l.s8.bf16 %v854
    %v1163 = vunpack.c.l.s8.bf16 %v855
    %v1164 = vunpack.c.l.s8.bf16 %v856
    %v1165 = vunpack.c.h.s8.bf16 %v853
    %v1166 = vunpack.c.h.s8.bf16 %v854
    %v1167 = vunpack.c.h.s8.bf16 %v855
    %v1168 = vunpack.c.h.s8.bf16 %v856
    %v1169 = vunpack.c.l.s8.bf16 %v857
    %v1170 = vunpack.c.l.s8.bf16 %v858
    %v1171 = vunpack.c.l.s8.bf16 %v859
    %v1172 = vunpack.c.l.s8.bf16 %v860
    %v1173 = vunpack.c.h.s8.bf16 %v857
    %v1174 = vunpack.c.h.s8.bf16 %v858
    %v1175 = vunpack.c.h.s8.bf16 %v859
    %v1176 = vunpack.c.h.s8.bf16 %v860
    %v1177 = vunpack.c.l.s8.bf16 %v861
    %v1178 = vunpack.c.l.s8.bf16 %v862
    %v1179 = vunpack.c.l.s8.bf16 %v863
    %v1180 = vunpack.c.l.s8.bf16 %v864
    %v1181 = vunpack.c.h.s8.bf16 %v861
    %v1182 = vunpack.c.h.s8.bf16 %v862
    %v1183 = vunpack.c.h.s8.bf16 %v863
    %v1184 = vunpack.c.h.s8.bf16 %v864
    %v1185 = vunpack.c.l.s8.bf16 %v865
    %v1186 = vunpack.c.l.s8.bf16 %v866
    %v1187 = vunpack.c.l.s8.bf16 %v867
    %v1188 = vunpack.c.l.s8.bf16 %v868
    %v1189 = vunpack.c.h.s8.bf16 %v865
    %v1190 = vunpack.c.h.s8.bf16 %v866
    %v1191 = vunpack.c.h.s8.bf16 %v867
    %v1192 = vunpack.c.h.s8.bf16 %v868
    %v1193 = vunpack.c.l.s8.bf16 %v869
    %v1194 = vunpack.c.l.s8.bf16 %v870
    %v1195 = vunpack.c.l.s8.bf16 %v871
    %v1196 = vunpack.c.l.s8.bf16 %v872
    %v1197 = vunpack.c.h.s8.bf16 %v869
    %v1198 = vunpack.c.h.s8.bf16 %v870
    %v1199 = vunpack.c.h.s8.bf16 %v871
    %v1200 = vunpack.c.h.s8.bf16 %v872
    %v1201 = vunpack.c.l.s8.bf16 %v873
    %v1202 = vunpack.c.l.s8.bf16 %v874
    %v1203 = vunpack.c.l.s8.bf16 %v875
    %v1204 = vunpack.c.l.s8.bf16 %v876
    %v1205 = vunpack.c.h.s8.bf16 %v873
    %v1206 = vunpack.c.h.s8.bf16 %v874
    %v1207 = vunpack.c.h.s8.bf16 %v875
    %v1208 = vunpack.c.h.s8.bf16 %v876
    %v1209 = vunpack.c.l.s8.bf16 %v877
    %v1210 = vunpack.c.l.s8.bf16 %v878
    %v1211 = vunpack.c.l.s8.bf16 %v879
    %v1212 = vunpack.c.l.s8.bf16 %v880
    %v1213 = vunpack.c.h.s8.bf16 %v877
    %v1214 = vunpack.c.h.s8.bf16 %v878
    %v1215 = vunpack.c.h.s8.bf16 %v879
    %v1216 = vunpack.c.h.s8.bf16 %v880
    %v1217 = vunpack.c.l.s8.bf16 %v881
    %v1218 = vunpack.c.l.s8.bf16 %v882
    %v1219 = vunpack.c.l.s8.bf16 %v883
    %v1220 = vunpack.c.l.s8.bf16 %v884
    %v1221 = vunpack.c.h.s8.bf16 %v881
    %v1222 = vunpack.c.h.s8.bf16 %v882
    %v1223 = vunpack.c.h.s8.bf16 %v883
    %v1224 = vunpack.c.h.s8.bf16 %v884
    %v1225 = vunpack.c.l.s8.bf16 %v885
    %v1226 = vunpack.c.l.s8.bf16 %v886
    %v1227 = vunpack.c.l.s8.bf16 %v887
    %v1228 = vunpack.c.l.s8.bf16 %v888
    %v1229 = vunpack.c.h.s8.bf16 %v885
    %v1230 = vunpack.c.h.s8.bf16 %v886
    %v1231 = vunpack.c.h.s8.bf16 %v887
    %v1232 = vunpack.c.h.s8.bf16 %v888
    %v1233 = vunpack.c.l.s8.bf16 %v889
    %v1234 = vunpack.c.l.s8.bf16 %v890
    %v1235 = vunpack.c.l.s8.bf16 %v891
    %v1236 = vunpack.c.l.s8.bf16 %v892
    %v1237 = vunpack.c.h.s8.bf16 %v889
    %v1238 = vunpack.c.h.s8.bf16 %v890
    %v1239 = vunpack.c.h.s8.bf16 %v891
    %v1240 = vunpack.c.h.s8.bf16 %v892
    %v1241 = vunpack.c.l.s8.bf16 %v893
    %v1242 = vunpack.c.l.s8.bf16 %v894
    %v1243 = vunpack.c.l.s8.bf16 %v895
    %v1244 = vunpack.c.l.s8.bf16 %v896
    %v1245 = vunpack.c.h.s8.bf16 %v893
    %v1246 = vunpack.c.h.s8.bf16 %v894
    %v1247 = vunpack.c.h.s8.bf16 %v895
    %v1248 = vunpack.c.h.s8.bf16 %v896
    %v1249 = vunpack.c.l.s8.bf16 %v897
    %v1250 = vunpack.c.l.s8.bf16 %v898
    %v1251 = vunpack.c.l.s8.bf16 %v899
    %v1252 = vunpack.c.l.s8.bf16 %v900
    %v1253 = vunpack.c.h.s8.bf16 %v897
    %v1254 = vunpack.c.h.s8.bf16 %v898
    %v1255 = vunpack.c.h.s8.bf16 %v899
    %v1256 = vunpack.c.h.s8.bf16 %v900
    %v1257 = vunpack.c.l.s8.bf16 %v901
    %v1258 = vunpack.c.l.s8.bf16 %v902
    %v1259 = vunpack.c.l.s8.bf16 %v903
    %v1260 = vunpack.c.l.s8.bf16 %v904
    %v1261 = vunpack.c.h.s8.bf16 %v901
    %v1262 = vunpack.c.h.s8.bf16 %v902
    %v1263 = vunpack.c.h.s8.bf16 %v903
    %v1264 = vunpack.c.h.s8.bf16 %v904
    %v1265 = vunpack.c.l.s8.bf16 %v905
    %v1266 = vunpack.c.l.s8.bf16 %v906
    %v1267 = vunpack.c.l.s8.bf16 %v907
    %v1268 = vunpack.c.l.s8.bf16 %v908
    %v1269 = vunpack.c.h.s8.bf16 %v905
    %v1270 = vunpack.c.h.s8.bf16 %v906
    %v1271 = vunpack.c.h.s8.bf16 %v907
    %v1272 = vunpack.c.h.s8.bf16 %v908
    %v1273 = vunpack.c.l.s8.bf16 %v909
    %v1274 = vunpack.c.l.s8.bf16 %v910
    %v1275 = vunpack.c.l.s8.bf16 %v911
    %v1276 = vunpack.c.l.s8.bf16 %v912
    %v1277 = vunpack.c.h.s8.bf16 %v909
    %v1278 = vunpack.c.h.s8.bf16 %v910
    %v1279 = vunpack.c.h.s8.bf16 %v911
    %v1280 = vunpack.c.h.s8.bf16 %v912
    %v1281 = vunpack.c.l.s8.bf16 %v913
    %v1282 = vunpack.c.l.s8.bf16 %v914
    %v1283 = vunpack.c.l.s8.bf16 %v915
    %v1284 = vunpack.c.l.s8.bf16 %v916
    %v1285 = vunpack.c.h.s8.bf16 %v913
    %v1286 = vunpack.c.h.s8.bf16 %v914
    %v1287 = vunpack.c.h.s8.bf16 %v915
    %v1288 = vunpack.c.h.s8.bf16 %v916
    %v1289 = vunpack.c.l.s8.bf16 %v917
    %v1290 = vunpack.c.l.s8.bf16 %v918
    %v1291 = vunpack.c.l.s8.bf16 %v919
    %v1292 = vunpack.c.l.s8.bf16 %v920
    %v1293 = vunpack.c.h.s8.bf16 %v917
    %v1294 = vunpack.c.h.s8.bf16 %v918
    %v1295 = vunpack.c.h.s8.bf16 %v919
    %v1296 = vunpack.c.h.s8.bf16 %v920
    %v1297 = vunpack.c.l.s8.bf16 %v921
    %v1298 = vunpack.c.l.s8.bf16 %v922
    %v1299 = vunpack.c.l.s8.bf16 %v923
    %v1300 = vunpack.c.l.s8.bf16 %v924
    %v1301 = vunpack.c.h.s8.bf16 %v921
    %v1302 = vunpack.c.h.s8.bf16 %v922
    %v1303 = vunpack.c.h.s8.bf16 %v923
    %v1304 = vunpack.c.h.s8.bf16 %v924
    %v1305 = vunpack.c.l.s8.bf16 %v925
    %v1306 = vunpack.c.l.s8.bf16 %v926
    %v1307 = vunpack.c.l.s8.bf16 %v927
    %v1308 = vunpack.c.l.s8.bf16 %v928
    %v1309 = vunpack.c.h.s8.bf16 %v925
    %v1310 = vunpack.c.h.s8.bf16 %v926
    %v1311 = vunpack.c.h.s8.bf16 %v927
    %v1312 = vunpack.c.h.s8.bf16 %v928
    %v1313 = vunpack.c.l.s8.bf16 %v929
    %v1314 = vunpack.c.l.s8.bf16 %v930
    %v1315 = vunpack.c.l.s8.bf16 %v931
    %v1316 = vunpack.c.l.s8.bf16 %v932
    %v1317 = vunpack.c.h.s8.bf16 %v929
    %v1318 = vunpack.c.h.s8.bf16 %v930
    %v1319 = vunpack.c.h.s8.bf16 %v931
    %v1320 = vunpack.c.h.s8.bf16 %v932
    %v1321 = vunpack.c.l.s8.bf16 %v933
    %v1322 = vunpack.c.l.s8.bf16 %v934
    %v1323 = vunpack.c.l.s8.bf16 %v935
    %v1324 = vunpack.c.l.s8.bf16 %v936
    %v1325 = vunpack.c.h.s8.bf16 %v933
    %v1326 = vunpack.c.h.s8.bf16 %v934
    %v1327 = vunpack.c.h.s8.bf16 %v935
    %v1328 = vunpack.c.h.s8.bf16 %v936
    %v1329 = vunpack.c.l.s8.bf16 %v937
    %v1330 = vunpack.c.l.s8.bf16 %v938
    %v1331 = vunpack.c.l.s8.bf16 %v939
    %v1332 = vunpack.c.l.s8.bf16 %v940
    %v1333 = vunpack.c.h.s8.bf16 %v937
    %v1334 = vunpack.c.h.s8.bf16 %v938
    %v1335 = vunpack.c.h.s8.bf16 %v939
    %v1336 = vunpack.c.h.s8.bf16 %v940
    %v1337 = vunpack.c.l.s8.bf16 %v941
    %v1338 = vunpack.c.l.s8.bf16 %v942
    %v1339 = vunpack.c.l.s8.bf16 %v943
    %v1340 = vunpack.c.l.s8.bf16 %v944
    %v1341 = vunpack.c.h.s8.bf16 %v941
    %v1342 = vunpack.c.h.s8.bf16 %v942
    %v1343 = vunpack.c.h.s8.bf16 %v943
    %v1344 = vunpack.c.h.s8.bf16 %v944
    %v1345 = vunpack.c.l.s8.bf16 %v945
    %v1346 = vunpack.c.l.s8.bf16 %v946
    %v1347 = vunpack.c.l.s8.bf16 %v947
    %v1348 = vunpack.c.l.s8.bf16 %v948
    %v1349 = vunpack.c.h.s8.bf16 %v945
    %v1350 = vunpack.c.h.s8.bf16 %v946
    %v1351 = vunpack.c.h.s8.bf16 %v947
    %v1352 = vunpack.c.h.s8.bf16 %v948
    %v1353 = vunpack.c.l.s8.bf16 %v949
    %v1354 = vunpack.c.l.s8.bf16 %v950
    %v1355 = vunpack.c.l.s8.bf16 %v951
    %v1356 = vunpack.c.l.s8.bf16 %v952
    %v1357 = vunpack.c.h.s8.bf16 %v949
    %v1358 = vunpack.c.h.s8.bf16 %v950
    %v1359 = vunpack.c.h.s8.bf16 %v951
    %v1360 = vunpack.c.h.s8.bf16 %v952
    %v1361 = vunpack.c.l.s8.bf16 %v953
    %v1362 = vunpack.c.l.s8.bf16 %v954
    %v1363 = vunpack.c.l.s8.bf16 %v955
    %v1364 = vunpack.c.l.s8.bf16 %v956
    %v1365 = vunpack.c.h.s8.bf16 %v953
    %v1366 = vunpack.c.h.s8.bf16 %v954
    %v1367 = vunpack.c.h.s8.bf16 %v955
    %v1368 = vunpack.c.h.s8.bf16 %v956
    %v1369 = vunpack.c.l.s8.bf16 %v957
    %v1370 = vunpack.c.l.s8.bf16 %v958
    %v1371 = vunpack.c.l.s8.bf16 %v959
    %v1372 = vunpack.c.l.s8.bf16 %v960
    %v1373 = vunpack.c.h.s8.bf16 %v957
    %v1374 = vunpack.c.h.s8.bf16 %v958
    %v1375 = vunpack.c.h.s8.bf16 %v959
    %v1376 = vunpack.c.h.s8.bf16 %v960
    %v1377 = vunpack.c.l.s8.bf16 %v961
    %v1378 = vunpack.c.l.s8.bf16 %v962
    %v1379 = vunpack.c.l.s8.bf16 %v963
    %v1380 = vunpack.c.l.s8.bf16 %v964
    %v1381 = vunpack.c.h.s8.bf16 %v961
    %v1382 = vunpack.c.h.s8.bf16 %v962
    %v1383 = vunpack.c.h.s8.bf16 %v963
    %v1384 = vunpack.c.h.s8.bf16 %v964
    %v1385 = vunpack.c.l.s8.bf16 %v965
    %v1386 = vunpack.c.l.s8.bf16 %v966
    %v1387 = vunpack.c.l.s8.bf16 %v967
    %v1388 = vunpack.c.l.s8.bf16 %v968
    %v1389 = vunpack.c.h.s8.bf16 %v965
    %v1390 = vunpack.c.h.s8.bf16 %v966
    %v1391 = vunpack.c.h.s8.bf16 %v967
    %v1392 = vunpack.c.h.s8.bf16 %v968
    %v1393 = vunpack.c.l.s8.bf16 %v969
    %v1394 = vunpack.c.l.s8.bf16 %v970
    %v1395 = vunpack.c.l.s8.bf16 %v971
    %v1396 = vunpack.c.l.s8.bf16 %v972
    %v1397 = vunpack.c.h.s8.bf16 %v969
    %v1398 = vunpack.c.h.s8.bf16 %v970
    %v1399 = vunpack.c.h.s8.bf16 %v971
    %v1400 = vunpack.c.h.s8.bf16 %v972
    %v1401 = vunpack.c.l.s8.bf16 %v973
    %v1402 = vunpack.c.l.s8.bf16 %v974
    %v1403 = vunpack.c.l.s8.bf16 %v975
    %v1404 = vunpack.c.l.s8.bf16 %v976
    %v1405 = vunpack.c.h.s8.bf16 %v973
    %v1406 = vunpack.c.h.s8.bf16 %v974
    %v1407 = vunpack.c.h.s8.bf16 %v975
    %v1408 = vunpack.c.h.s8.bf16 %v976
    %v1409 = vunpack.c.l.s8.bf16 %v977
    %v1410 = vunpack.c.l.s8.bf16 %v978
    %v1411 = vunpack.c.l.s8.bf16 %v979
    %v1412 = vunpack.c.l.s8.bf16 %v980
    %v1413 = vunpack.c.h.s8.bf16 %v977
    %v1414 = vunpack.c.h.s8.bf16 %v978
    %v1415 = vunpack.c.h.s8.bf16 %v979
    %v1416 = vunpack.c.h.s8.bf16 %v980
    %v1417 = vunpack.c.l.s8.bf16 %v981
    %v1418 = vunpack.c.l.s8.bf16 %v982
    %v1419 = vunpack.c.l.s8.bf16 %v983
    %v1420 = vunpack.c.l.s8.bf16 %v984
    %v1421 = vunpack.c.h.s8.bf16 %v981
    %v1422 = vunpack.c.h.s8.bf16 %v982
    %v1423 = vunpack.c.h.s8.bf16 %v983
    %v1424 = vunpack.c.h.s8.bf16 %v984
    %v1425 = vunpack.c.l.s8.bf16 %v985
    %v1426 = vunpack.c.l.s8.bf16 %v986
    %v1427 = vunpack.c.l.s8.bf16 %v987
    %v1428 = vunpack.c.l.s8.bf16 %v988
    %v1429 = vunpack.c.h.s8.bf16 %v985
    %v1430 = vunpack.c.h.s8.bf16 %v986
    %v1431 = vunpack.c.h.s8.bf16 %v987
    %v1432 = vunpack.c.h.s8.bf16 %v988
    %v1433 = vunpack.c.l.s8.bf16 %v989
    %v1434 = vunpack.c.l.s8.bf16 %v990
    %v1435 = vunpack.c.l.s8.bf16 %v991
    %v1436 = vunpack.c.l.s8.bf16 %v992
    %v1437 = vunpack.c.h.s8.bf16 %v989
    %v1438 = vunpack.c.h.s8.bf16 %v990
    %v1439 = vunpack.c.h.s8.bf16 %v991
    %v1440 = vunpack.c.h.s8.bf16 %v992
    %v1441 = vunpack.c.l.s8.bf16 %v993
    %v1442 = vunpack.c.l.s8.bf16 %v994
    %v1443 = vunpack.c.l.s8.bf16 %v995
    %v1444 = vunpack.c.l.s8.bf16 %v996
    %v1445 = vunpack.c.h.s8.bf16 %v993
    %v1446 = vunpack.c.h.s8.bf16 %v994
    %v1447 = vunpack.c.h.s8.bf16 %v995
    %v1448 = vunpack.c.h.s8.bf16 %v996
    %v1449 = vunpack.c.l.s8.bf16 %v997
    %v1450 = vunpack.c.l.s8.bf16 %v998
    %v1451 = vunpack.c.l.s8.bf16 %v999
    %v1452 = vunpack.c.l.s8.bf16 %v1000
    %v1453 = vunpack.c.h.s8.bf16 %v997
    %v1454 = vunpack.c.h.s8.bf16 %v998
    %v1455 = vunpack.c.h.s8.bf16 %v999
    %v1456 = vunpack.c.h.s8.bf16 %v1000
    %v1457 = vunpack.c.l.s8.bf16 %v1001
    %v1458 = vunpack.c.l.s8.bf16 %v1002
    %v1459 = vunpack.c.l.s8.bf16 %v1003
    %v1460 = vunpack.c.l.s8.bf16 %v1004
    %v1461 = vunpack.c.h.s8.bf16 %v1001
    %v1462 = vunpack.c.h.s8.bf16 %v1002
    %v1463 = vunpack.c.h.s8.bf16 %v1003
    %v1464 = vunpack.c.h.s8.bf16 %v1004
    %v1465 = vunpack.c.l.s8.bf16 %v1005
    %v1466 = vunpack.c.l.s8.bf16 %v1006
    %v1467 = vunpack.c.l.s8.bf16 %v1007
    %v1468 = vunpack.c.l.s8.bf16 %v1008
    %v1469 = vunpack.c.h.s8.bf16 %v1005
    %v1470 = vunpack.c.h.s8.bf16 %v1006
    %v1471 = vunpack.c.h.s8.bf16 %v1007
    %v1472 = vunpack.c.h.s8.bf16 %v1008
    %v1473 = vunpack.c.l.s8.bf16 %v1009
    %v1474 = vunpack.c.l.s8.bf16 %v1010
    %v1475 = vunpack.c.l.s8.bf16 %v1011
    %v1476 = vunpack.c.l.s8.bf16 %v1012
    %v1477 = vunpack.c.h.s8.bf16 %v1009
    %v1478 = vunpack.c.h.s8.bf16 %v1010
    %v1479 = vunpack.c.h.s8.bf16 %v1011
    %v1480 = vunpack.c.h.s8.bf16 %v1012
    %v1481 = vunpack.c.l.s8.bf16 %v1013
    %v1482 = vunpack.c.l.s8.bf16 %v1014
    %v1483 = vunpack.c.l.s8.bf16 %v1015
    %v1484 = vunpack.c.l.s8.bf16 %v1016
    %v1485 = vunpack.c.h.s8.bf16 %v1013
    %v1486 = vunpack.c.h.s8.bf16 %v1014
    %v1487 = vunpack.c.h.s8.bf16 %v1015
    %v1488 = vunpack.c.h.s8.bf16 %v1016
    %v1489 = vunpack.c.l.s8.bf16 %v1017
    %v1490 = vunpack.c.l.s8.bf16 %v1018
    %v1491 = vunpack.c.l.s8.bf16 %v1019
    %v1492 = vunpack.c.l.s8.bf16 %v1020
    %v1493 = vunpack.c.h.s8.bf16 %v1017
    %v1494 = vunpack.c.h.s8.bf16 %v1018
    %v1495 = vunpack.c.h.s8.bf16 %v1019
    %v1496 = vunpack.c.h.s8.bf16 %v1020
    %v1497 = vunpack.c.l.s8.bf16 %v1021
    %v1498 = vunpack.c.l.s8.bf16 %v1022
    %v1499 = vunpack.c.l.s8.bf16 %v1023
    %v1500 = vunpack.c.l.s8.bf16 %v1024
    %v1501 = vunpack.c.h.s8.bf16 %v1021
    %v1502 = vunpack.c.h.s8.bf16 %v1022
    %v1503 = vunpack.c.h.s8.bf16 %v1023
    %v1504 = vunpack.c.h.s8.bf16 %v1024
    %v1505 = vunpack.c.l.s8.bf16 %v1025
    %v1506 = vunpack.c.l.s8.bf16 %v1026
    %v1507 = vunpack.c.l.s8.bf16 %v1027
    %v1508 = vunpack.c.l.s8.bf16 %v1028
    %v1509 = vunpack.c.h.s8.bf16 %v1025
    %v1510 = vunpack.c.h.s8.bf16 %v1026
    %v1511 = vunpack.c.h.s8.bf16 %v1027
    %v1512 = vunpack.c.h.s8.bf16 %v1028
    %v1513 = vunpack.c.l.s8.bf16 %v1029
    %v1514 = vunpack.c.l.s8.bf16 %v1030
    %v1515 = vunpack.c.l.s8.bf16 %v1031
    %v1516 = vunpack.c.l.s8.bf16 %v1032
    %v1517 = vunpack.c.h.s8.bf16 %v1029
    %v1518 = vunpack.c.h.s8.bf16 %v1030
    %v1519 = vunpack.c.h.s8.bf16 %v1031
    %v1520 = vunpack.c.h.s8.bf16 %v1032
    %v1521 = vunpack.c.l.s8.bf16 %v1033
    %v1522 = vunpack.c.l.s8.bf16 %v1034
    %v1523 = vunpack.c.l.s8.bf16 %v1035
    %v1524 = vunpack.c.l.s8.bf16 %v1036
    %v1525 = vunpack.c.h.s8.bf16 %v1033
    %v1526 = vunpack.c.h.s8.bf16 %v1034
    %v1527 = vunpack.c.h.s8.bf16 %v1035
    %v1528 = vunpack.c.h.s8.bf16 %v1036
    %v1529 = vunpack.c.l.s8.bf16 %v1037
    %v1530 = vunpack.c.l.s8.bf16 %v1038
    %v1531 = vunpack.c.l.s8.bf16 %v1039
    %v1532 = vunpack.c.l.s8.bf16 %v1040
    %v1533 = vunpack.c.h.s8.bf16 %v1037
    %v1534 = vunpack.c.h.s8.bf16 %v1038
    %v1535 = vunpack.c.h.s8.bf16 %v1039
    %v1536 = vunpack.c.h.s8.bf16 %v1040
    %v1537 = vunpack.c.l.s8.bf16 %v1041
    %v1538 = vunpack.c.l.s8.bf16 %v1042
    %v1539 = vunpack.c.l.s8.bf16 %v1043
    %v1540 = vunpack.c.l.s8.bf16 %v1044
    %v1541 = vunpack.c.h.s8.bf16 %v1041
    %v1542 = vunpack.c.h.s8.bf16 %v1042
    %v1543 = vunpack.c.h.s8.bf16 %v1043
    %v1544 = vunpack.c.h.s8.bf16 %v1044
    %v1545 = vunpack.c.l.s8.bf16 %v1045
    %v1546 = vunpack.c.l.s8.bf16 %v1046
    %v1547 = vunpack.c.l.s8.bf16 %v1047
    %v1548 = vunpack.c.l.s8.bf16 %v1048
    %v1549 = vunpack.c.h.s8.bf16 %v1045
    %v1550 = vunpack.c.h.s8.bf16 %v1046
    %v1551 = vunpack.c.h.s8.bf16 %v1047
    %v1552 = vunpack.c.h.s8.bf16 %v1048
    %v1553 = vunpack.c.l.s8.bf16 %v1049
    %v1554 = vunpack.c.l.s8.bf16 %v1050
    %v1555 = vunpack.c.l.s8.bf16 %v1051
    %v1556 = vunpack.c.l.s8.bf16 %v1052
    %v1557 = vunpack.c.h.s8.bf16 %v1049
    %v1558 = vunpack.c.h.s8.bf16 %v1050
    %v1559 = vunpack.c.h.s8.bf16 %v1051
    %v1560 = vunpack.c.h.s8.bf16 %v1052
    %v1561 = vunpack.c.l.s8.bf16 %v1053
    %v1562 = vunpack.c.l.s8.bf16 %v1054
    %v1563 = vunpack.c.l.s8.bf16 %v1055
    %v1564 = vunpack.c.l.s8.bf16 %v1056
    %v1565 = vunpack.c.h.s8.bf16 %v1053
    %v1566 = vunpack.c.h.s8.bf16 %v1054
    %v1567 = vunpack.c.h.s8.bf16 %v1055
    %v1568 = vunpack.c.h.s8.bf16 %v1056
    %1569 = vmatprep.subr.bf16.mxu0 %v1058
    %1570 = vmatpush1.bf16.msra.mxu0 %v1057
    %1571 = vmatprep.subr.bf16.mxu0 %v1062
    %1572 = vmatpush1.bf16.msra.mxu0 %v1061
    %1573 = vmatprep.subr.bf16.mxu0 %v1066
    %1574 = vmatpush1.bf16.msra.mxu0 %v1065
    %1575 = vmatprep.subr.bf16.mxu0 %v1070
    %1576 = vmatpush1.bf16.msra.mxu0 %v1069
    %1577 = vmatprep.subr.bf16.mxu0 %v1074
    %1578 = vmatpush1.bf16.msra.mxu0 %v1073
    %1579 = vmatprep.subr.bf16.mxu0 %v1078
    %1580 = vmatpush1.bf16.msra.mxu0 %v1077
    %1581 = vmatprep.subr.bf16.mxu0 %v1082
    %1582 = vmatpush1.bf16.msra.mxu0 %v1081
    %1583 = vmatprep.subr.bf16.mxu0 %v1086
    %1584 = vmatpush1.bf16.msra.mxu0 %v1085
    %1585 = vmatprep.subr.bf16.mxu0 %v1090
    %1586 = vmatpush1.bf16.msra.mxu0 %v1089
    %1587 = vmatprep.subr.bf16.mxu0 %v1094
    %1588 = vmatpush1.bf16.msra.mxu0 %v1093
    %1589 = vmatprep.subr.bf16.mxu0 %v1098
    %1590 = vmatpush1.bf16.msra.mxu0 %v1097
    %1591 = vmatprep.subr.bf16.mxu0 %v1102
    %1592 = vmatpush1.bf16.msra.mxu0 %v1101
    %1593 = vmatprep.subr.bf16.mxu0 %v1106
    %1594 = vmatpush1.bf16.msra.mxu0 %v1105
    %1595 = vmatprep.subr.bf16.mxu0 %v1110
    %1596 = vmatpush1.bf16.msra.mxu0 %v1109
    %1597 = vmatprep.subr.bf16.mxu0 %v1114
    %1598 = vmatpush1.bf16.msra.mxu0 %v1113
    %1599 = vmatprep.subr.bf16.mxu0 %v1118
    %1600 = vmatpush1.bf16.msra.mxu0 %v1117
    %1601 = vmatprep.mubr.bf16.mxu0 %v786
    %1602 = vmatmul.mubr.bf16.gmra.mrb[0].mxu0 %v785
    %v1603 = vpop.f32.mrb[0].mxu0
    %v1604 = vadd.f32 0.0, %v1603
    %v1605 = vpop.f32.mrb[0].mxu0
    %v1606 = vadd.f32 0.0, %v1605
    %v1607 = vpop.f32.mrb[0].mxu0
    %v1608 = vpop.f32.mrb[0].mxu0
    %1609 = vdwg.mxu0
    %1610 = vmatprep.subr.bf16.mxu0 %v1122
    %1611 = vmatpush1.bf16.msra.mxu0 %v1121
    %1612 = vmatprep.subr.bf16.mxu0 %v1126
    %1613 = vmatpush1.bf16.msra.mxu0 %v1125
    %1614 = vmatprep.subr.bf16.mxu0 %v1130
    %1615 = vmatpush1.bf16.msra.mxu0 %v1129
    %1616 = vmatprep.subr.bf16.mxu0 %v1134
    %1617 = vmatpush1.bf16.msra.mxu0 %v1133
    %1618 = vmatprep.subr.bf16.mxu0 %v1138
    %1619 = vmatpush1.bf16.msra.mxu0 %v1137
    %1620 = vmatprep.subr.bf16.mxu0 %v1142
    %1621 = vmatpush1.bf16.msra.mxu0 %v1141
    %1622 = vmatprep.subr.bf16.mxu0 %v1146
    %1623 = vmatpush1.bf16.msra.mxu0 %v1145
    %1624 = vmatprep.subr.bf16.mxu0 %v1150
    %1625 = vmatpush1.bf16.msra.mxu0 %v1149
    %1626 = vmatprep.subr.bf16.mxu0 %v1154
    %1627 = vmatpush1.bf16.msra.mxu0 %v1153
    %1628 = vmatprep.subr.bf16.mxu0 %v1158
    %1629 = vmatpush1.bf16.msra.mxu0 %v1157
    %1630 = vmatprep.subr.bf16.mxu0 %v1162
    %1631 = vmatpush1.bf16.msra.mxu0 %v1161
    %1632 = vmatprep.subr.bf16.mxu0 %v1166
    %1633 = vmatpush1.bf16.msra.mxu0 %v1165
    %1634 = vmatprep.subr.bf16.mxu0 %v1170
    %1635 = vmatpush1.bf16.msra.mxu0 %v1169
    %1636 = vmatprep.subr.bf16.mxu0 %v1174
    %1637 = vmatpush1.bf16.msra.mxu0 %v1173
    %1638 = vmatprep.subr.bf16.mxu0 %v1178
    %1639 = vmatpush1.bf16.msra.mxu0 %v1177
    %1640 = vmatprep.subr.bf16.mxu0 %v1182
    %1641 = vmatpush1.bf16.msra.mxu0 %v1181
    %1642 = vmatprep.mubr.bf16.mxu0 %v788
    %1643 = vmatmul.mubr.bf16.gmra.mrb[0].mxu0 %v787
    %v1644 = vpop.f32.mrb[0].mxu0
    %v1645 = vadd.f32 %v1604, %v1644
    %v1646 = vpop.f32.mrb[0].mxu0
    %v1647 = vadd.f32 %v1606, %v1646
    %v1648 = vpop.f32.mrb[0].mxu0
    %v1649 = vpop.f32.mrb[0].mxu0
    %1650 = vdwg.mxu0
    %1651 = vmatprep.subr.bf16.mxu0 %v1186
    %1652 = vmatpush1.bf16.msra.mxu0 %v1185
    %1653 = vmatprep.subr.bf16.mxu0 %v1190
    %1654 = vmatpush1.bf16.msra.mxu0 %v1189
    %1655 = vmatprep.subr.bf16.mxu0 %v1194
    %1656 = vmatpush1.bf16.msra.mxu0 %v1193
    %1657 = vmatprep.subr.bf16.mxu0 %v1198
    %1658 = vmatpush1.bf16.msra.mxu0 %v1197
    %1659 = vmatprep.subr.bf16.mxu0 %v1202
    %1660 = vmatpush1.bf16.msra.mxu0 %v1201
    %1661 = vmatprep.subr.bf16.mxu0 %v1206
    %1662 = vmatpush1.bf16.msra.mxu0 %v1205
    %1663 = vmatprep.subr.bf16.mxu0 %v1210
    %1664 = vmatpush1.bf16.msra.mxu0 %v1209
    %1665 = vmatprep.subr.bf16.mxu0 %v1214
    %1666 = vmatpush1.bf16.msra.mxu0 %v1213
    %1667 = vmatprep.subr.bf16.mxu0 %v1218
    %1668 = vmatpush1.bf16.msra.mxu0 %v1217
    %1669 = vmatprep.subr.bf16.mxu0 %v1222
    %1670 = vmatpush1.bf16.msra.mxu0 %v1221
    %1671 = vmatprep.subr.bf16.mxu0 %v1226
    %1672 = vmatpush1.bf16.msra.mxu0 %v1225
    %1673 = vmatprep.subr.bf16.mxu0 %v1230
    %1674 = vmatpush1.bf16.msra.mxu0 %v1229
    %1675 = vmatprep.subr.bf16.mxu0 %v1234
    %1676 = vmatpush1.bf16.msra.mxu0 %v1233
    %1677 = vmatprep.subr.bf16.mxu0 %v1238
    %1678 = vmatpush1.bf16.msra.mxu0 %v1237
    %1679 = vmatprep.subr.bf16.mxu0 %v1242
    %1680 = vmatpush1.bf16.msra.mxu0 %v1241
    %1681 = vmatprep.subr.bf16.mxu0 %v1246
    %1682 = vmatpush1.bf16.msra.mxu0 %v1245
    %1683 = vmatprep.mubr.bf16.mxu0 %v790
    %1684 = vmatmul.mubr.bf16.gmra.mrb[0].mxu0 %v789
    %v1685 = vpop.f32.mrb[0].mxu0
    %v1686 = vadd.f32 %v1645, %v1685
    %v1687 = vpop.f32.mrb[0].mxu0
    %v1688 = vadd.f32 %v1647, %v1687
    %v1689 = vpop.f32.mrb[0].mxu0
    %v1690 = vpop.f32.mrb[0].mxu0
    %1691 = vdwg.mxu0
    %1692 = vmatprep.subr.bf16.mxu0 %v1250
    %1693 = vmatpush1.bf16.msra.mxu0 %v1249
    %1694 = vmatprep.subr.bf16.mxu0 %v1254
    %1695 = vmatpush1.bf16.msra.mxu0 %v1253
    %1696 = vmatprep.subr.bf16.mxu0 %v1258
    %1697 = vmatpush1.bf16.msra.mxu0 %v1257
    %1698 = vmatprep.subr.bf16.mxu0 %v1262
    %1699 = vmatpush1.bf16.msra.mxu0 %v1261
    %1700 = vmatprep.subr.bf16.mxu0 %v1266
    %1701 = vmatpush1.bf16.msra.mxu0 %v1265
    %1702 = vmatprep.subr.bf16.mxu0 %v1270
    %1703 = vmatpush1.bf16.msra.mxu0 %v1269
    %1704 = vmatprep.subr.bf16.mxu0 %v1274
    %1705 = vmatpush1.bf16.msra.mxu0 %v1273
    %1706 = vmatprep.subr.bf16.mxu0 %v1278
    %1707 = vmatpush1.bf16.msra.mxu0 %v1277
    %1708 = vmatprep.subr.bf16.mxu0 %v1282
    %1709 = vmatpush1.bf16.msra.mxu0 %v1281
    %1710 = vmatprep.subr.bf16.mxu0 %v1286
    %1711 = vmatpush1.bf16.msra.mxu0 %v1285
    %1712 = vmatprep.subr.bf16.mxu0 %v1290
    %1713 = vmatpush1.bf16.msra.mxu0 %v1289
    %1714 = vmatprep.subr.bf16.mxu0 %v1294
    %1715 = vmatpush1.bf16.msra.mxu0 %v1293
    %1716 = vmatprep.subr.bf16.mxu0 %v1298
    %1717 = vmatpush1.bf16.msra.mxu0 %v1297
    %1718 = vmatprep.subr.bf16.mxu0 %v1302
    %1719 = vmatpush1.bf16.msra.mxu0 %v1301
    %1720 = vmatprep.subr.bf16.mxu0 %v1306
    %1721 = vmatpush1.bf16.msra.mxu0 %v1305
    %1722 = vmatprep.subr.bf16.mxu0 %v1310
    %1723 = vmatpush1.bf16.msra.mxu0 %v1309
    %1724 = vmatprep.mubr.bf16.mxu0 %v792
    %1725 = vmatmul.mubr.bf16.gmra.mrb[0].mxu0 %v791
    %v1726 = vpop.f32.mrb[0].mxu0
    %v1727 = vadd.f32 %v1686, %v1726
    %v1728 = vpop.f32.mrb[0].mxu0
    %v1729 = vadd.f32 %v1688, %v1728
    %v1730 = vpop.f32.mrb[0].mxu0
    %v1731 = vpop.f32.mrb[0].mxu0
    %1732 = vdwg.mxu0
    %1733 = vmatprep.subr.bf16.mxu0 %v1314
    %1734 = vmatpush1.bf16.msra.mxu0 %v1313
    %1735 = vmatprep.subr.bf16.mxu0 %v1318
    %1736 = vmatpush1.bf16.msra.mxu0 %v1317
    %1737 = vmatprep.subr.bf16.mxu0 %v1322
    %1738 = vmatpush1.bf16.msra.mxu0 %v1321
    %1739 = vmatprep.subr.bf16.mxu0 %v1326
    %1740 = vmatpush1.bf16.msra.mxu0 %v1325
    %1741 = vmatprep.subr.bf16.mxu0 %v1330
    %1742 = vmatpush1.bf16.msra.mxu0 %v1329
    %1743 = vmatprep.subr.bf16.mxu0 %v1334
    %1744 = vmatpush1.bf16.msra.mxu0 %v1333
    %1745 = vmatprep.subr.bf16.mxu0 %v1338
    %1746 = vmatpush1.bf16.msra.mxu0 %v1337
    %1747 = vmatprep.subr.bf16.mxu0 %v1342
    %1748 = vmatpush1.bf16.msra.mxu0 %v1341
    %1749 = vmatprep.subr.bf16.mxu0 %v1346
    %1750 = vmatpush1.bf16.msra.mxu0 %v1345
    %1751 = vmatprep.subr.bf16.mxu0 %v1350
    %1752 = vmatpush1.bf16.msra.mxu0 %v1349
    %1753 = vmatprep.subr.bf16.mxu0 %v1354
    %1754 = vmatpush1.bf16.msra.mxu0 %v1353
    %1755 = vmatprep.subr.bf16.mxu0 %v1358
    %1756 = vmatpush1.bf16.msra.mxu0 %v1357
    %1757 = vmatprep.subr.bf16.mxu0 %v1362
    %1758 = vmatpush1.bf16.msra.mxu0 %v1361
    %1759 = vmatprep.subr.bf16.mxu0 %v1366
    %1760 = vmatpush1.bf16.msra.mxu0 %v1365
    %1761 = vmatprep.subr.bf16.mxu0 %v1370
    %1762 = vmatpush1.bf16.msra.mxu0 %v1369
    %1763 = vmatprep.subr.bf16.mxu0 %v1374
    %1764 = vmatpush1.bf16.msra.mxu0 %v1373
    %1765 = vmatprep.mubr.bf16.mxu0 %v794
    %1766 = vmatmul.mubr.bf16.gmra.mrb[0].mxu0 %v793
    %v1767 = vpop.f32.mrb[0].mxu0
    %v1768 = vadd.f32 %v1727, %v1767
    %v1769 = vpop.f32.mrb[0].mxu0
    %v1770 = vadd.f32 %v1729, %v1769
    %v1771 = vpop.f32.mrb[0].mxu0
    %v1772 = vpop.f32.mrb[0].mxu0
    %1773 = vdwg.mxu0
    %1774 = vmatprep.subr.bf16.mxu0 %v1378
    %1775 = vmatpush1.bf16.msra.mxu0 %v1377
    %1776 = vmatprep.subr.bf16.mxu0 %v1382
    %1777 = vmatpush1.bf16.msra.mxu0 %v1381
    %1778 = vmatprep.subr.bf16.mxu0 %v1386
    %1779 = vmatpush1.bf16.msra.mxu0 %v1385
    %1780 = vmatprep.subr.bf16.mxu0 %v1390
    %1781 = vmatpush1.bf16.msra.mxu0 %v1389
    %1782 = vmatprep.subr.bf16.mxu0 %v1394
    %1783 = vmatpush1.bf16.msra.mxu0 %v1393
    %1784 = vmatprep.subr.bf16.mxu0 %v1398
    %1785 = vmatpush1.bf16.msra.mxu0 %v1397
    %1786 = vmatprep.subr.bf16.mxu0 %v1402
    %1787 = vmatpush1.bf16.msra.mxu0 %v1401
    %1788 = vmatprep.subr.bf16.mxu0 %v1406
    %1789 = vmatpush1.bf16.msra.mxu0 %v1405
    %1790 = vmatprep.subr.bf16.mxu0 %v1410
    %1791 = vmatpush1.bf16.msra.mxu0 %v1409
    %1792 = vmatprep.subr.bf16.mxu0 %v1414
    %1793 = vmatpush1.bf16.msra.mxu0 %v1413
    %1794 = vmatprep.subr.bf16.mxu0 %v1418
    %1795 = vmatpush1.bf16.msra.mxu0 %v1417
    %1796 = vmatprep.subr.bf16.mxu0 %v1422
    %1797 = vmatpush1.bf16.msra.mxu0 %v1421
    %1798 = vmatprep.subr.bf16.mxu0 %v1426
    %1799 = vmatpush1.bf16.msra.mxu0 %v1425
    %1800 = vmatprep.subr.bf16.mxu0 %v1430
    %1801 = vmatpush1.bf16.msra.mxu0 %v1429
    %1802 = vmatprep.subr.bf16.mxu0 %v1434
    %1803 = vmatpush1.bf16.msra.mxu0 %v1433
    %1804 = vmatprep.subr.bf16.mxu0 %v1438
    %1805 = vmatpush1.bf16.msra.mxu0 %v1437
    %1806 = vmatprep.mubr.bf16.mxu0 %v796
    %1807 = vmatmul.mubr.bf16.gmra.mrb[0].mxu0 %v795
    %v1808 = vpop.f32.mrb[0].mxu0
    %v1809 = vadd.f32 %v1768, %v1808
    %v1810 = vpop.f32.mrb[0].mxu0
    %v1811 = vadd.f32 %v1770, %v1810
    %v1812 = vpop.f32.mrb[0].mxu0
    %v1813 = vpop.f32.mrb[0].mxu0
    %1814 = vdwg.mxu0
    %1815 = vmatprep.subr.bf16.mxu0 %v1442
    %1816 = vmatpush1.bf16.msra.mxu0 %v1441
    %1817 = vmatprep.subr.bf16.mxu0 %v1446
    %1818 = vmatpush1.bf16.msra.mxu0 %v1445
    %1819 = vmatprep.subr.bf16.mxu0 %v1450
    %1820 = vmatpush1.bf16.msra.mxu0 %v1449
    %1821 = vmatprep.subr.bf16.mxu0 %v1454
    %1822 = vmatpush1.bf16.msra.mxu0 %v1453
    %1823 = vmatprep.subr.bf16.mxu0 %v1458
    %1824 = vmatpush1.bf16.msra.mxu0 %v1457
    %1825 = vmatprep.subr.bf16.mxu0 %v1462
    %1826 = vmatpush1.bf16.msra.mxu0 %v1461
    %1827 = vmatprep.subr.bf16.mxu0 %v1466
    %1828 = vmatpush1.bf16.msra.mxu0 %v1465
    %1829 = vmatprep.subr.bf16.mxu0 %v1470
    %1830 = vmatpush1.bf16.msra.mxu0 %v1469
    %1831 = vmatprep.subr.bf16.mxu0 %v1474
    %1832 = vmatpush1.bf16.msra.mxu0 %v1473
    %1833 = vmatprep.subr.bf16.mxu0 %v1478
    %1834 = vmatpush1.bf16.msra.mxu0 %v1477
    %1835 = vmatprep.subr.bf16.mxu0 %v1482
    %1836 = vmatpush1.bf16.msra.mxu0 %v1481
    %1837 = vmatprep.subr.bf16.mxu0 %v1486
    %1838 = vmatpush1.bf16.msra.mxu0 %v1485
    %1839 = vmatprep.subr.bf16.mxu0 %v1490
    %1840 = vmatpush1.bf16.msra.mxu0 %v1489
    %1841 = vmatprep.subr.bf16.mxu0 %v1494
    %1842 = vmatpush1.bf16.msra.mxu0 %v1493
    %1843 = vmatprep.subr.bf16.mxu0 %v1498
    %1844 = vmatpush1.bf16.msra.mxu0 %v1497
    %1845 = vmatprep.subr.bf16.mxu0 %v1502
    %1846 = vmatpush1.bf16.msra.mxu0 %v1501
    %1847 = vmatprep.mubr.bf16.mxu0 %v798
    %1848 = vmatmul.mubr.bf16.gmra.mrb[0].mxu0 %v797
    %v1849 = vpop.f32.mrb[0].mxu0
    %v1850 = vadd.f32 %v1809, %v1849
    %v1851 = vpop.f32.mrb[0].mxu0
    %v1852 = vadd.f32 %v1811, %v1851
    %v1853 = vpop.f32.mrb[0].mxu0
    %v1854 = vpop.f32.mrb[0].mxu0
    %1855 = vdwg.mxu0
    %1856 = vmatprep.subr.bf16.mxu0 %v1506
    %1857 = vmatpush1.bf16.msra.mxu0 %v1505
    %1858 = vmatprep.subr.bf16.mxu0 %v1510
    %1859 = vmatpush1.bf16.msra.mxu0 %v1509
    %1860 = vmatprep.subr.bf16.mxu0 %v1514
    %1861 = vmatpush1.bf16.msra.mxu0 %v1513
    %1862 = vmatprep.subr.bf16.mxu0 %v1518
    %1863 = vmatpush1.bf16.msra.mxu0 %v1517
    %1864 = vmatprep.subr.bf16.mxu0 %v1522
    %1865 = vmatpush1.bf16.msra.mxu0 %v1521
    %1866 = vmatprep.subr.bf16.mxu0 %v1526
    %1867 = vmatpush1.bf16.msra.mxu0 %v1525
    %1868 = vmatprep.subr.bf16.mxu0 %v1530
    %1869 = vmatpush1.bf16.msra.mxu0 %v1529
    %1870 = vmatprep.subr.bf16.mxu0 %v1534
    %1871 = vmatpush1.bf16.msra.mxu0 %v1533
    %1872 = vmatprep.subr.bf16.mxu0 %v1538
    %1873 = vmatpush1.bf16.msra.mxu0 %v1537
    %1874 = vmatprep.subr.bf16.mxu0 %v1542
    %1875 = vmatpush1.bf16.msra.mxu0 %v1541
    %1876 = vmatprep.subr.bf16.mxu0 %v1546
    %1877 = vmatpush1.bf16.msra.mxu0 %v1545
    %1878 = vmatprep.subr.bf16.mxu0 %v1550
    %1879 = vmatpush1.bf16.msra.mxu0 %v1549
    %1880 = vmatprep.subr.bf16.mxu0 %v1554
    %1881 = vmatpush1.bf16.msra.mxu0 %v1553
    %1882 = vmatprep.subr.bf16.mxu0 %v1558
    %1883 = vmatpush1.bf16.msra.mxu0 %v1557
    %1884 = vmatprep.subr.bf16.mxu0 %v1562
    %1885 = vmatpush1.bf16.msra.mxu0 %v1561
    %1886 = vmatprep.subr.bf16.mxu0 %v1566
    %1887 = vmatpush1.bf16.msra.mxu0 %v1565
    %1888 = vmatprep.mubr.bf16.mxu0 %v800
    %1889 = vmatmul.mubr.bf16.gmra.mrb[0].mxu0 %v799
    %v1890 = vpop.f32.mrb[0].mxu0
    %v1891 = vadd.f32 %v1850, %v1890
    %v1892 = vpop.f32.mrb[0].mxu0
    %v1893 = vadd.f32 %v1852, %v1892
    %v1894 = vpop.f32.mrb[0].mxu0
    %v1895 = vpop.f32.mrb[0].mxu0
    %1896 = vdwg.mxu0
    %1897 = vmatprep.subr.bf16.mxu0 %v1060
    %1898 = vmatpush1.bf16.msra.mxu0 %v1059
    %1899 = vmatprep.subr.bf16.mxu0 %v1064
    %1900 = vmatpush1.bf16.msra.mxu0 %v1063
    %1901 = vmatprep.subr.bf16.mxu0 %v1068
    %1902 = vmatpush1.bf16.msra.mxu0 %v1067
    %1903 = vmatprep.subr.bf16.mxu0 %v1072
    %1904 = vmatpush1.bf16.msra.mxu0 %v1071
    %1905 = vmatprep.subr.bf16.mxu0 %v1076
    %1906 = vmatpush1.bf16.msra.mxu0 %v1075
    %1907 = vmatprep.subr.bf16.mxu0 %v1080
    %1908 = vmatpush1.bf16.msra.mxu0 %v1079
    %1909 = vmatprep.subr.bf16.mxu0 %v1084
    %1910 = vmatpush1.bf16.msra.mxu0 %v1083
    %1911 = vmatprep.subr.bf16.mxu0 %v1088
    %1912 = vmatpush1.bf16.msra.mxu0 %v1087
    %1913 = vmatprep.subr.bf16.mxu0 %v1092
    %1914 = vmatpush1.bf16.msra.mxu0 %v1091
    %1915 = vmatprep.subr.bf16.mxu0 %v1096
    %1916 = vmatpush1.bf16.msra.mxu0 %v1095
    %1917 = vmatprep.subr.bf16.mxu0 %v1100
    %1918 = vmatpush1.bf16.msra.mxu0 %v1099
    %1919 = vmatprep.subr.bf16.mxu0 %v1104
    %1920 = vmatpush1.bf16.msra.mxu0 %v1103
    %1921 = vmatprep.subr.bf16.mxu0 %v1108
    %1922 = vmatpush1.bf16.msra.mxu0 %v1107
    %1923 = vmatprep.subr.bf16.mxu0 %v1112
    %1924 = vmatpush1.bf16.msra.mxu0 %v1111
    %1925 = vmatprep.subr.bf16.mxu0 %v1116
    %1926 = vmatpush1.bf16.msra.mxu0 %v1115
    %1927 = vmatprep.subr.bf16.mxu0 %v1120
    %1928 = vmatpush1.bf16.msra.mxu0 %v1119
    %1929 = vmatprep.mubr.bf16.mxu0 %v786
    %1930 = vmatmul.mubr.bf16.gmra.mrb[0].mxu0 %v785
    %v1931 = vpop.f32.mrb[0].mxu0
    %v1932 = vadd.f32 0.0, %v1931
    %v1933 = vpop.f32.mrb[0].mxu0
    %v1934 = vadd.f32 0.0, %v1933
    %v1935 = vpop.f32.mrb[0].mxu0
    %v1936 = vpop.f32.mrb[0].mxu0
    %1937 = vdwg.mxu0
    %1938 = vmatprep.subr.bf16.mxu0 %v1124
    %1939 = vmatpush1.bf16.msra.mxu0 %v1123
    %1940 = vmatprep.subr.bf16.mxu0 %v1128
    %1941 = vmatpush1.bf16.msra.mxu0 %v1127
    %1942 = vmatprep.subr.bf16.mxu0 %v1132
    %1943 = vmatpush1.bf16.msra.mxu0 %v1131
    %1944 = vmatprep.subr.bf16.mxu0 %v1136
    %1945 = vmatpush1.bf16.msra.mxu0 %v1135
    %1946 = vmatprep.subr.bf16.mxu0 %v1140
    %1947 = vmatpush1.bf16.msra.mxu0 %v1139
    %1948 = vmatprep.subr.bf16.mxu0 %v1144
    %1949 = vmatpush1.bf16.msra.mxu0 %v1143
    %1950 = vmatprep.subr.bf16.mxu0 %v1148
    %1951 = vmatpush1.bf16.msra.mxu0 %v1147
    %1952 = vmatprep.subr.bf16.mxu0 %v1152
    %1953 = vmatpush1.bf16.msra.mxu0 %v1151
    %1954 = vmatprep.subr.bf16.mxu0 %v1156
    %1955 = vmatpush1.bf16.msra.mxu0 %v1155
    %1956 = vmatprep.subr.bf16.mxu0 %v1160
    %1957 = vmatpush1.bf16.msra.mxu0 %v1159
    %1958 = vmatprep.subr.bf16.mxu0 %v1164
    %1959 = vmatpush1.bf16.msra.mxu0 %v1163
    %1960 = vmatprep.subr.bf16.mxu0 %v1168
    %1961 = vmatpush1.bf16.msra.mxu0 %v1167
    %1962 = vmatprep.subr.bf16.mxu0 %v1172
    %1963 = vmatpush1.bf16.msra.mxu0 %v1171
    %1964 = vmatprep.subr.bf16.mxu0 %v1176
    %1965 = vmatpush1.bf16.msra.mxu0 %v1175
    %1966 = vmatprep.subr.bf16.mxu0 %v1180
    %1967 = vmatpush1.bf16.msra.mxu0 %v1179
    %1968 = vmatprep.subr.bf16.mxu0 %v1184
    %1969 = vmatpush1.bf16.msra.mxu0 %v1183
    %1970 = vmatprep.mubr.bf16.mxu0 %v788
    %1971 = vmatmul.mubr.bf16.gmra.mrb[0].mxu0 %v787
    %v1972 = vpop.f32.mrb[0].mxu0
    %v1973 = vadd.f32 %v1932, %v1972
    %v1974 = vpop.f32.mrb[0].mxu0
    %v1975 = vadd.f32 %v1934, %v1974
    %v1976 = vpop.f32.mrb[0].mxu0
    %v1977 = vpop.f32.mrb[0].mxu0
    %1978 = vdwg.mxu0
    %1979 = vmatprep.subr.bf16.mxu0 %v1188
    %1980 = vmatpush1.bf16.msra.mxu0 %v1187
    %1981 = vmatprep.subr.bf16.mxu0 %v1192
    %1982 = vmatpush1.bf16.msra.mxu0 %v1191
    %1983 = vmatprep.subr.bf16.mxu0 %v1196
    %1984 = vmatpush1.bf16.msra.mxu0 %v1195
    %1985 = vmatprep.subr.bf16.mxu0 %v1200
    %1986 = vmatpush1.bf16.msra.mxu0 %v1199
    %1987 = vmatprep.subr.bf16.mxu0 %v1204
    %1988 = vmatpush1.bf16.msra.mxu0 %v1203
    %1989 = vmatprep.subr.bf16.mxu0 %v1208
    %1990 = vmatpush1.bf16.msra.mxu0 %v1207
    %1991 = vmatprep.subr.bf16.mxu0 %v1212
    %1992 = vmatpush1.bf16.msra.mxu0 %v1211
    %1993 = vmatprep.subr.bf16.mxu0 %v1216
    %1994 = vmatpush1.bf16.msra.mxu0 %v1215
    %1995 = vmatprep.subr.bf16.mxu0 %v1220
    %1996 = vmatpush1.bf16.msra.mxu0 %v1219
    %1997 = vmatprep.subr.bf16.mxu0 %v1224
    %1998 = vmatpush1.bf16.msra.mxu0 %v1223
    %1999 = vmatprep.subr.bf16.mxu0 %v1228
    %2000 = vmatpush1.bf16.msra.mxu0 %v1227
    %2001 = vmatprep.subr.bf16.mxu0 %v1232
    %2002 = vmatpush1.bf16.msra.mxu0 %v1231
    %2003 = vmatprep.subr.bf16.mxu0 %v1236
    %2004 = vmatpush1.bf16.msra.mxu0 %v1235
    %2005 = vmatprep.subr.bf16.mxu0 %v1240
    %2006 = vmatpush1.bf16.msra.mxu0 %v1239
    %2007 = vmatprep.subr.bf16.mxu0 %v1244
    %2008 = vmatpush1.bf16.msra.mxu0 %v1243
    %2009 = vmatprep.subr.bf16.mxu0 %v1248
    %2010 = vmatpush1.bf16.msra.mxu0 %v1247
    %2011 = vmatprep.mubr.bf16.mxu0 %v790
    %2012 = vmatmul.mubr.bf16.gmra.mrb[0].mxu0 %v789
    %v2013 = vpop.f32.mrb[0].mxu0
    %v2014 = vadd.f32 %v1973, %v2013
    %v2015 = vpop.f32.mrb[0].mxu0
    %v2016 = vadd.f32 %v1975, %v2015
    %v2017 = vpop.f32.mrb[0].mxu0
    %v2018 = vpop.f32.mrb[0].mxu0
    %2019 = vdwg.mxu0
    %2020 = vmatprep.subr.bf16.mxu0 %v1252
    %2021 = vmatpush1.bf16.msra.mxu0 %v1251
    %2022 = vmatprep.subr.bf16.mxu0 %v1256
    %2023 = vmatpush1.bf16.msra.mxu0 %v1255
    %2024 = vmatprep.subr.bf16.mxu0 %v1260
    %2025 = vmatpush1.bf16.msra.mxu0 %v1259
    %2026 = vmatprep.subr.bf16.mxu0 %v1264
    %2027 = vmatpush1.bf16.msra.mxu0 %v1263
    %2028 = vmatprep.subr.bf16.mxu0 %v1268
    %2029 = vmatpush1.bf16.msra.mxu0 %v1267
    %2030 = vmatprep.subr.bf16.mxu0 %v1272
    %2031 = vmatpush1.bf16.msra.mxu0 %v1271
    %2032 = vmatprep.subr.bf16.mxu0 %v1276
    %2033 = vmatpush1.bf16.msra.mxu0 %v1275
    %2034 = vmatprep.subr.bf16.mxu0 %v1280
    %2035 = vmatpush1.bf16.msra.mxu0 %v1279
    %2036 = vmatprep.subr.bf16.mxu0 %v1284
    %2037 = vmatpush1.bf16.msra.mxu0 %v1283
    %2038 = vmatprep.subr.bf16.mxu0 %v1288
    %2039 = vmatpush1.bf16.msra.mxu0 %v1287
    %2040 = vmatprep.subr.bf16.mxu0 %v1292
    %2041 = vmatpush1.bf16.msra.mxu0 %v1291
    %2042 = vmatprep.subr.bf16.mxu0 %v1296
    %2043 = vmatpush1.bf16.msra.mxu0 %v1295
    %2044 = vmatprep.subr.bf16.mxu0 %v1300
    %2045 = vmatpush1.bf16.msra.mxu0 %v1299
    %2046 = vmatprep.subr.bf16.mxu0 %v1304
    %2047 = vmatpush1.bf16.msra.mxu0 %v1303
    %2048 = vmatprep.subr.bf16.mxu0 %v1308
    %2049 = vmatpush1.bf16.msra.mxu0 %v1307
    %2050 = vmatprep.subr.bf16.mxu0 %v1312
    %2051 = vmatpush1.bf16.msra.mxu0 %v1311
    %2052 = vmatprep.mubr.bf16.mxu0 %v792
    %2053 = vmatmul.mubr.bf16.gmra.mrb[0].mxu0 %v791
    %v2054 = vpop.f32.mrb[0].mxu0
    %v2055 = vadd.f32 %v2014, %v2054
    %v2056 = vpop.f32.mrb[0].mxu0
    %v2057 = vadd.f32 %v2016, %v2056
    %v2058 = vpop.f32.mrb[0].mxu0
    %v2059 = vpop.f32.mrb[0].mxu0
    %2060 = vdwg.mxu0
    %2061 = vmatprep.subr.bf16.mxu0 %v1316
    %2062 = vmatpush1.bf16.msra.mxu0 %v1315
    %2063 = vmatprep.subr.bf16.mxu0 %v1320
    %2064 = vmatpush1.bf16.msra.mxu0 %v1319
    %2065 = vmatprep.subr.bf16.mxu0 %v1324
    %2066 = vmatpush1.bf16.msra.mxu0 %v1323
    %2067 = vmatprep.subr.bf16.mxu0 %v1328
    %2068 = vmatpush1.bf16.msra.mxu0 %v1327
    %2069 = vmatprep.subr.bf16.mxu0 %v1332
    %2070 = vmatpush1.bf16.msra.mxu0 %v1331
    %2071 = vmatprep.subr.bf16.mxu0 %v1336
    %2072 = vmatpush1.bf16.msra.mxu0 %v1335
    %2073 = vmatprep.subr.bf16.mxu0 %v1340
    %2074 = vmatpush1.bf16.msra.mxu0 %v1339
    %2075 = vmatprep.subr.bf16.mxu0 %v1344
    %2076 = vmatpush1.bf16.msra.mxu0 %v1343
    %2077 = vmatprep.subr.bf16.mxu0 %v1348
    %2078 = vmatpush1.bf16.msra.mxu0 %v1347
    %2079 = vmatprep.subr.bf16.mxu0 %v1352
    %2080 = vmatpush1.bf16.msra.mxu0 %v1351
    %2081 = vmatprep.subr.bf16.mxu0 %v1356
    %2082 = vmatpush1.bf16.msra.mxu0 %v1355
    %2083 = vmatprep.subr.bf16.mxu0 %v1360
    %2084 = vmatpush1.bf16.msra.mxu0 %v1359
    %2085 = vmatprep.subr.bf16.mxu0 %v1364
    %2086 = vmatpush1.bf16.msra.mxu0 %v1363
    %2087 = vmatprep.subr.bf16.mxu0 %v1368
    %2088 = vmatpush1.bf16.msra.mxu0 %v1367
    %2089 = vmatprep.subr.bf16.mxu0 %v1372
    %2090 = vmatpush1.bf16.msra.mxu0 %v1371
    %2091 = vmatprep.subr.bf16.mxu0 %v1376
    %2092 = vmatpush1.bf16.msra.mxu0 %v1375
    %2093 = vmatprep.mubr.bf16.mxu0 %v794
    %2094 = vmatmul.mubr.bf16.gmra.mrb[0].mxu0 %v793
    %v2095 = vpop.f32.mrb[0].mxu0
    %v2096 = vadd.f32 %v2055, %v2095
    %v2097 = vpop.f32.mrb[0].mxu0
    %v2098 = vadd.f32 %v2057, %v2097
    %v2099 = vpop.f32.mrb[0].mxu0
    %v2100 = vpop.f32.mrb[0].mxu0
    %2101 = vdwg.mxu0
    %2102 = vmatprep.subr.bf16.mxu0 %v1380
    %2103 = vmatpush1.bf16.msra.mxu0 %v1379
    %2104 = vmatprep.subr.bf16.mxu0 %v1384
    %2105 = vmatpush1.bf16.msra.mxu0 %v1383
    %2106 = vmatprep.subr.bf16.mxu0 %v1388
    %2107 = vmatpush1.bf16.msra.mxu0 %v1387
    %2108 = vmatprep.subr.bf16.mxu0 %v1392
    %2109 = vmatpush1.bf16.msra.mxu0 %v1391
    %2110 = vmatprep.subr.bf16.mxu0 %v1396
    %2111 = vmatpush1.bf16.msra.mxu0 %v1395
    %2112 = vmatprep.subr.bf16.mxu0 %v1400
    %2113 = vmatpush1.bf16.msra.mxu0 %v1399
    %2114 = vmatprep.subr.bf16.mxu0 %v1404
    %2115 = vmatpush1.bf16.msra.mxu0 %v1403
    %2116 = vmatprep.subr.bf16.mxu0 %v1408
    %2117 = vmatpush1.bf16.msra.mxu0 %v1407
    %2118 = vmatprep.subr.bf16.mxu0 %v1412
    %2119 = vmatpush1.bf16.msra.mxu0 %v1411
    %2120 = vmatprep.subr.bf16.mxu0 %v1416
    %2121 = vmatpush1.bf16.msra.mxu0 %v1415
    %2122 = vmatprep.subr.bf16.mxu0 %v1420
    %2123 = vmatpush1.bf16.msra.mxu0 %v1419
    %2124 = vmatprep.subr.bf16.mxu0 %v1424
    %2125 = vmatpush1.bf16.msra.mxu0 %v1423
    %2126 = vmatprep.subr.bf16.mxu0 %v1428
    %2127 = vmatpush1.bf16.msra.mxu0 %v1427
    %2128 = vmatprep.subr.bf16.mxu0 %v1432
    %2129 = vmatpush1.bf16.msra.mxu0 %v1431
    %2130 = vmatprep.subr.bf16.mxu0 %v1436
    %2131 = vmatpush1.bf16.msra.mxu0 %v1435
    %2132 = vmatprep.subr.bf16.mxu0 %v1440
    %2133 = vmatpush1.bf16.msra.mxu0 %v1439
    %2134 = vmatprep.mubr.bf16.mxu0 %v796
    %2135 = vmatmul.mubr.bf16.gmra.mrb[0].mxu0 %v795
    %v2136 = vpop.f32.mrb[0].mxu0
    %v2137 = vadd.f32 %v2096, %v2136
    %v2138 = vpop.f32.mrb[0].mxu0
    %v2139 = vadd.f32 %v2098, %v2138
    %v2140 = vpop.f32.mrb[0].mxu0
    %v2141 = vpop.f32.mrb[0].mxu0
    %2142 = vdwg.mxu0
    %2143 = vmatprep.subr.bf16.mxu0 %v1444
    %2144 = vmatpush1.bf16.msra.mxu0 %v1443
    %2145 = vmatprep.subr.bf16.mxu0 %v1448
    %2146 = vmatpush1.bf16.msra.mxu0 %v1447
    %2147 = vmatprep.subr.bf16.mxu0 %v1452
    %2148 = vmatpush1.bf16.msra.mxu0 %v1451
    %2149 = vmatprep.subr.bf16.mxu0 %v1456
    %2150 = vmatpush1.bf16.msra.mxu0 %v1455
    %2151 = vmatprep.subr.bf16.mxu0 %v1460
    %2152 = vmatpush1.bf16.msra.mxu0 %v1459
    %2153 = vmatprep.subr.bf16.mxu0 %v1464
    %2154 = vmatpush1.bf16.msra.mxu0 %v1463
    %2155 = vmatprep.subr.bf16.mxu0 %v1468
    %2156 = vmatpush1.bf16.msra.mxu0 %v1467
    %2157 = vmatprep.subr.bf16.mxu0 %v1472
    %2158 = vmatpush1.bf16.msra.mxu0 %v1471
    %2159 = vmatprep.subr.bf16.mxu0 %v1476
    %2160 = vmatpush1.bf16.msra.mxu0 %v1475
    %2161 = vmatprep.subr.bf16.mxu0 %v1480
    %2162 = vmatpush1.bf16.msra.mxu0 %v1479
    %2163 = vmatprep.subr.bf16.mxu0 %v1484
    %2164 = vmatpush1.bf16.msra.mxu0 %v1483
    %2165 = vmatprep.subr.bf16.mxu0 %v1488
    %2166 = vmatpush1.bf16.msra.mxu0 %v1487
    %2167 = vmatprep.subr.bf16.mxu0 %v1492
    %2168 = vmatpush1.bf16.msra.mxu0 %v1491
    %2169 = vmatprep.subr.bf16.mxu0 %v1496
    %2170 = vmatpush1.bf16.msra.mxu0 %v1495
    %2171 = vmatprep.subr.bf16.mxu0 %v1500
    %2172 = vmatpush1.bf16.msra.mxu0 %v1499
    %2173 = vmatprep.subr.bf16.mxu0 %v1504
    %2174 = vmatpush1.bf16.msra.mxu0 %v1503
    %2175 = vmatprep.mubr.bf16.mxu0 %v798
    %2176 = vmatmul.mubr.bf16.gmra.mrb[0].mxu0 %v797
    %v2177 = vpop.f32.mrb[0].mxu0
    %v2178 = vadd.f32 %v2137, %v2177
    %v2179 = vpop.f32.mrb[0].mxu0
    %v2180 = vadd.f32 %v2139, %v2179
    %v2181 = vpop.f32.mrb[0].mxu0
    %v2182 = vpop.f32.mrb[0].mxu0
    %2183 = vdwg.mxu0
    %2184 = vmatprep.subr.bf16.mxu0 %v1508
    %2185 = vmatpush1.bf16.msra.mxu0 %v1507
    %2186 = vmatprep.subr.bf16.mxu0 %v1512
    %2187 = vmatpush1.bf16.msra.mxu0 %v1511
    %2188 = vmatprep.subr.bf16.mxu0 %v1516
    %2189 = vmatpush1.bf16.msra.mxu0 %v1515
    %2190 = vmatprep.subr.bf16.mxu0 %v1520
    %2191 = vmatpush1.bf16.msra.mxu0 %v1519
    %2192 = vmatprep.subr.bf16.mxu0 %v1524
    %2193 = vmatpush1.bf16.msra.mxu0 %v1523
    %2194 = vmatprep.subr.bf16.mxu0 %v1528
    %2195 = vmatpush1.bf16.msra.mxu0 %v1527
    %2196 = vmatprep.subr.bf16.mxu0 %v1532
    %2197 = vmatpush1.bf16.msra.mxu0 %v1531
    %2198 = vmatprep.subr.bf16.mxu0 %v1536
    %2199 = vmatpush1.bf16.msra.mxu0 %v1535
    %2200 = vmatprep.subr.bf16.mxu0 %v1540
    %2201 = vmatpush1.bf16.msra.mxu0 %v1539
    %2202 = vmatprep.subr.bf16.mxu0 %v1544
    %2203 = vmatpush1.bf16.msra.mxu0 %v1543
    %2204 = vmatprep.subr.bf16.mxu0 %v1548
    %2205 = vmatpush1.bf16.msra.mxu0 %v1547
    %2206 = vmatprep.subr.bf16.mxu0 %v1552
    %2207 = vmatpush1.bf16.msra.mxu0 %v1551
    %2208 = vmatprep.subr.bf16.mxu0 %v1556
    %2209 = vmatpush1.bf16.msra.mxu0 %v1555
    %2210 = vmatprep.subr.bf16.mxu0 %v1560
    %2211 = vmatpush1.bf16.msra.mxu0 %v1559
    %2212 = vmatprep.subr.bf16.mxu0 %v1564
    %2213 = vmatpush1.bf16.msra.mxu0 %v1563
    %2214 = vmatprep.subr.bf16.mxu0 %v1568
    %2215 = vmatpush1.bf16.msra.mxu0 %v1567
    %2216 = vmatprep.mubr.bf16.mxu0 %v800
    %2217 = vmatmul.mubr.bf16.gmra.mrb[0].mxu0 %v799
    %v2218 = vpop.f32.mrb[0].mxu0
    %v2219 = vadd.f32 %v2178, %v2218
    %v2220 = vpop.f32.mrb[0].mxu0
    %v2221 = vadd.f32 %v2180, %v2220
    %v2222 = vpop.f32.mrb[0].mxu0
    %v2223 = vpop.f32.mrb[0].mxu0
    %2224 = vdwg.mxu0
    %v2225 = vld [vmem:[%s5] sm:$0xf]
    %v2227 = vlaneseq
    %v2228 = vshrl.u32 %v2227, 7
    %v2229 = vsub.s32 0, %v2228
    %v2230 = vrot.slane %v2225, %v2229
    %v2231 = vlaneseq
    %v2232 = vshrl.u32 %v2231, 7
    %v2233 = vsub.s32 1, %v2232
    %v2234 = vrot.slane %v2225, %v2233
    %v2235 = vlaneseq
    %v2236 = vshrl.u32 %v2235, 7
    %v2237 = vsub.s32 2, %v2236
    %v2238 = vrot.slane %v2225, %v2237
    %v2239 = vlaneseq
    %v2240 = vshrl.u32 %v2239, 7
    %v2241 = vsub.s32 3, %v2240
    %v2242 = vrot.slane %v2225, %v2241
    %v2247 = vmul.f32 %v1891, %v2230
    %v2248 = vmul.f32 %v1893, %v2234
    %v2249 = vmul.f32 %v2219, %v2238
    %v2250 = vmul.f32 %v2221, %v2242
    %v2251 = vld [vmem:[%s6] sm:$0xf]
    %v2253 = vlaneseq
    %v2254 = vshrl.u32 %v2253, 7
    %v2255 = vsub.s32 0, %v2254
    %v2256 = vrot.slane %v2251, %v2255
    %v2257 = vlaneseq
    %v2258 = vshrl.u32 %v2257, 7
    %v2259 = vsub.s32 1, %v2258
    %v2260 = vrot.slane %v2251, %v2259
    %v2261 = vlaneseq
    %v2262 = vshrl.u32 %v2261, 7
    %v2263 = vsub.s32 2, %v2262
    %v2264 = vrot.slane %v2251, %v2263
    %v2265 = vlaneseq
    %v2266 = vshrl.u32 %v2265, 7
    %v2267 = vsub.s32 3, %v2266
    %v2268 = vrot.slane %v2251, %v2267
    %v2273 = vadd.f32 %v2247, %v2256
    %v2274 = vadd.f32 %v2248, %v2260
    %v2275 = vadd.f32 %v2249, %v2264
    %v2276 = vadd.f32 %v2250, %v2268
    %v2277 = vmax.f32 %v2273, 0.0
    %v2278 = vmax.f32 %v2274, 0.0
    %v2279 = vmax.f32 %v2275, 0.0
    %v2280 = vmax.f32 %v2276, 0.0
    %v2281 = vld [vmem:[%s7] sm:$0xff]
    %v2282 = vld [vmem:[%s7 + $0x8] sm:$0xff]
    %v2283 = vld [vmem:[%s7 + $0x10] sm:$0xff]
    %v2284 = vld [vmem:[%s7 + $0x18] sm:$0xff]
    %v2285 = vld [vmem:[%s7 + $0x20] sm:$0xff]
    %v2286 = vld [vmem:[%s7 + $0x28] sm:$0xff]
    %v2287 = vld [vmem:[%s7 + $0x30] sm:$0xff]
    %v2288 = vld [vmem:[%s7 + $0x38] sm:$0xff]
    %v2289 = vld [vmem:[%s7 + $0x40] sm:$0xff]
    %v2290 = vld [vmem:[%s7 + $0x48] sm:$0xff]
    %v2291 = vld [vmem:[%s7 + $0x50] sm:$0xff]
    %v2292 = vld [vmem:[%s7 + $0x58] sm:$0xff]
    %v2293 = vld [vmem:[%s7 + $0x60] sm:$0xff]
    %v2294 = vld [vmem:[%s7 + $0x68] sm:$0xff]
    %v2295 = vld [vmem:[%s7 + $0x70] sm:$0xff]
    %v2296 = vld [vmem:[%s7 + $0x78] sm:$0xff]
    %v2297 = vld [vmem:[%s7 + $0x80] sm:$0xff]
    %v2298 = vld [vmem:[%s7 + $0x88] sm:$0xff]
    %v2299 = vld [vmem:[%s7 + $0x90] sm:$0xff]
    %v2300 = vld [vmem:[%s7 + $0x98] sm:$0xff]
    %v2301 = vld [vmem:[%s7 + $0xa0] sm:$0xff]
    %v2302 = vld [vmem:[%s7 + $0xa8] sm:$0xff]
    %v2303 = vld [vmem:[%s7 + $0xb0] sm:$0xff]
    %v2304 = vld [vmem:[%s7 + $0xb8] sm:$0xff]
    %v2305 = vld [vmem:[%s7 + $0xc0] sm:$0xff]
    %v2306 = vld [vmem:[%s7 + $0xc8] sm:$0xff]
    %v2307 = vld [vmem:[%s7 + $0xd0] sm:$0xff]
    %v2308 = vld [vmem:[%s7 + $0xd8] sm:$0xff]
    %v2309 = vld [vmem:[%s7 + $0xe0] sm:$0xff]
    %v2310 = vld [vmem:[%s7 + $0xe8] sm:$0xff]
    %v2311 = vld [vmem:[%s7 + $0xf0] sm:$0xff]
    %v2312 = vld [vmem:[%s7 + $0xf8] sm:$0xff]
    %v2313 = vld [vmem:[%s7 + $0x100] sm:$0xff]
    %v2314 = vld [vmem:[%s7 + $0x108] sm:$0xff]
    %v2315 = vld [vmem:[%s7 + $0x110] sm:$0xff]
    %v2316 = vld [vmem:[%s7 + $0x118] sm:$0xff]
    %v2317 = vld [vmem:[%s7 + $0x120] sm:$0xff]
    %v2318 = vld [vmem:[%s7 + $0x128] sm:$0xff]
    %v2319 = vld [vmem:[%s7 + $0x130] sm:$0xff]
    %v2320 = vld [vmem:[%s7 + $0x138] sm:$0xff]
    %v2321 = vld [vmem:[%s7 + $0x140] sm:$0xff]
    %v2322 = vld [vmem:[%s7 + $0x148] sm:$0xff]
    %v2323 = vld [vmem:[%s7 + $0x150] sm:$0xff]
    %v2324 = vld [vmem:[%s7 + $0x158] sm:$0xff]
    %v2325 = vld [vmem:[%s7 + $0x160] sm:$0xff]
    %v2326 = vld [vmem:[%s7 + $0x168] sm:$0xff]
    %v2327 = vld [vmem:[%s7 + $0x170] sm:$0xff]
    %v2328 = vld [vmem:[%s7 + $0x178] sm:$0xff]
    %v2329 = vld [vmem:[%s7 + $0x180] sm:$0xff]
    %v2330 = vld [vmem:[%s7 + $0x188] sm:$0xff]
    %v2331 = vld [vmem:[%s7 + $0x190] sm:$0xff]
    %v2332 = vld [vmem:[%s7 + $0x198] sm:$0xff]
    %v2333 = vld [vmem:[%s7 + $0x1a0] sm:$0xff]
    %v2334 = vld [vmem:[%s7 + $0x1a8] sm:$0xff]
    %v2335 = vld [vmem:[%s7 + $0x1b0] sm:$0xff]
    %v2336 = vld [vmem:[%s7 + $0x1b8] sm:$0xff]
    %v2337 = vld [vmem:[%s7 + $0x1c0] sm:$0xff]
    %v2338 = vld [vmem:[%s7 + $0x1c8] sm:$0xff]
    %v2339 = vld [vmem:[%s7 + $0x1d0] sm:$0xff]
    %v2340 = vld [vmem:[%s7 + $0x1d8] sm:$0xff]
    %v2341 = vld [vmem:[%s7 + $0x1e0] sm:$0xff]
    %v2342 = vld [vmem:[%s7 + $0x1e8] sm:$0xff]
    %v2343 = vld [vmem:[%s7 + $0x1f0] sm:$0xff]
    %v2344 = vld [vmem:[%s7 + $0x1f8] sm:$0xff]
    %v2345 = vld [vmem:[%s8] sm:$0x1]
    %v2347 = vlaneseq
    %v2348 = vshrl.u32 %v2347, 7
    %v2349 = vsub.s32 0, %v2348
    %v2350 = vrot.slane %v2345, %v2349
    %2352 = vmatprep.subr.mxu0 0.0
    %2353 = vmatpush1.msra.mxu0 %v2281
    %2354 = vmatprep.subr.mxu0 0.0
    %2355 = vmatpush1.msra.mxu0 %v2282
    %2356 = vmatprep.subr.mxu0 0.0
    %2357 = vmatpush1.msra.mxu0 %v2283
    %2358 = vmatprep.subr.mxu0 0.0
    %2359 = vmatpush1.msra.mxu0 %v2284
    %2360 = vmatprep.subr.mxu0 0.0
    %2361 = vmatpush1.msra.mxu0 %v2285
    %2362 = vmatprep.subr.mxu0 0.0
    %2363 = vmatpush1.msra.mxu0 %v2286
    %2364 = vmatprep.subr.mxu0 0.0
    %2365 = vmatpush1.msra.mxu0 %v2287
    %2366 = vmatprep.subr.mxu0 0.0
    %2367 = vmatpush1.msra.mxu0 %v2288
    %2368 = vmatprep.subr.mxu0 0.0
    %2369 = vmatpush1.msra.mxu0 %v2289
    %2370 = vmatprep.subr.mxu0 0.0
    %2371 = vmatpush1.msra.mxu0 %v2290
    %2372 = vmatprep.subr.mxu0 0.0
    %2373 = vmatpush1.msra.mxu0 %v2291
    %2374 = vmatprep.subr.mxu0 0.0
    %2375 = vmatpush1.msra.mxu0 %v2292
    %2376 = vmatprep.subr.mxu0 0.0
    %2377 = vmatpush1.msra.mxu0 %v2293
    %2378 = vmatprep.subr.mxu0 0.0
    %2379 = vmatpush1.msra.mxu0 %v2294
    %2380 = vmatprep.subr.mxu0 0.0
    %2381 = vmatpush1.msra.mxu0 %v2295
    %2382 = vmatprep.subr.mxu0 0.0
    %2383 = vmatpush1.msra.mxu0 %v2296
    %2384 = vmatprep.subr.mxu0 0.0
    %2385 = vmatpush1.msra.mxu0 %v2297
    %2386 = vmatprep.subr.mxu0 0.0
    %2387 = vmatpush1.msra.mxu0 %v2298
    %2388 = vmatprep.subr.mxu0 0.0
    %2389 = vmatpush1.msra.mxu0 %v2299
    %2390 = vmatprep.subr.mxu0 0.0
    %2391 = vmatpush1.msra.mxu0 %v2300
    %2392 = vmatprep.subr.mxu0 0.0
    %2393 = vmatpush1.msra.mxu0 %v2301
    %2394 = vmatprep.subr.mxu0 0.0
    %2395 = vmatpush1.msra.mxu0 %v2302
    %2396 = vmatprep.subr.mxu0 0.0
    %2397 = vmatpush1.msra.mxu0 %v2303
    %2398 = vmatprep.subr.mxu0 0.0
    %2399 = vmatpush1.msra.mxu0 %v2304
    %2400 = vmatprep.subr.mxu0 0.0
    %2401 = vmatpush1.msra.mxu0 %v2305
    %2402 = vmatprep.subr.mxu0 0.0
    %2403 = vmatpush1.msra.mxu0 %v2306
    %2404 = vmatprep.subr.mxu0 0.0
    %2405 = vmatpush1.msra.mxu0 %v2307
    %2406 = vmatprep.subr.mxu0 0.0
    %2407 = vmatpush1.msra.mxu0 %v2308
    %2408 = vmatprep.subr.mxu0 0.0
    %2409 = vmatpush1.msra.mxu0 %v2309
    %2410 = vmatprep.subr.mxu0 0.0
    %2411 = vmatpush1.msra.mxu0 %v2310
    %2412 = vmatprep.subr.mxu0 0.0
    %2413 = vmatpush1.msra.mxu0 %v2311
    %2414 = vmatprep.subr.mxu0 0.0
    %2415 = vmatpush1.msra.mxu0 %v2312
    %2416 = vmatprep.mubr.f32.mxu0 %v2278
    %2417 = vmatmul.mubr.f32.gmra.mrb[0].mxu0 %v2277
    %v2418 = vpop.f32.mrb[0].mxu0
    %v2419 = vadd.f32 %v2350, %v2418
    %v2420 = vpop.f32.mrb[0].mxu0
    %2421 = vdwg.mxu0
    %2422 = vmatprep.subr.mxu0 0.0
    %2423 = vmatpush1.msra.mxu0 %v2313
    %2424 = vmatprep.subr.mxu0 0.0
    %2425 = vmatpush1.msra.mxu0 %v2314
    %2426 = vmatprep.subr.mxu0 0.0
    %2427 = vmatpush1.msra.mxu0 %v2315
    %2428 = vmatprep.subr.mxu0 0.0
    %2429 = vmatpush1.msra.mxu0 %v2316
    %2430 = vmatprep.subr.mxu0 0.0
    %2431 = vmatpush1.msra.mxu0 %v2317
    %2432 = vmatprep.subr.mxu0 0.0
    %2433 = vmatpush1.msra.mxu0 %v2318
    %2434 = vmatprep.subr.mxu0 0.0
    %2435 = vmatpush1.msra.mxu0 %v2319
    %2436 = vmatprep.subr.mxu0 0.0
    %2437 = vmatpush1.msra.mxu0 %v2320
    %2438 = vmatprep.subr.mxu0 0.0
    %2439 = vmatpush1.msra.mxu0 %v2321
    %2440 = vmatprep.subr.mxu0 0.0
    %2441 = vmatpush1.msra.mxu0 %v2322
    %2442 = vmatprep.subr.mxu0 0.0
    %2443 = vmatpush1.msra.mxu0 %v2323
    %2444 = vmatprep.subr.mxu0 0.0
    %2445 = vmatpush1.msra.mxu0 %v2324
    %2446 = vmatprep.subr.mxu0 0.0
    %2447 = vmatpush1.msra.mxu0 %v2325
    %2448 = vmatprep.subr.mxu0 0.0
    %2449 = vmatpush1.msra.mxu0 %v2326
    %2450 = vmatprep.subr.mxu0 0.0
    %2451 = vmatpush1.msra.mxu0 %v2327
    %2452 = vmatprep.subr.mxu0 0.0
    %2453 = vmatpush1.msra.mxu0 %v2328
    %2454 = vmatprep.subr.mxu0 0.0
    %2455 = vmatpush1.msra.mxu0 %v2329
    %2456 = vmatprep.subr.mxu0 0.0
    %2457 = vmatpush1.msra.mxu0 %v2330
    %2458 = vmatprep.subr.mxu0 0.0
    %2459 = vmatpush1.msra.mxu0 %v2331
    %2460 = vmatprep.subr.mxu0 0.0
    %2461 = vmatpush1.msra.mxu0 %v2332
    %2462 = vmatprep.subr.mxu0 0.0
    %2463 = vmatpush1.msra.mxu0 %v2333
    %2464 = vmatprep.subr.mxu0 0.0
    %2465 = vmatpush1.msra.mxu0 %v2334
    %2466 = vmatprep.subr.mxu0 0.0
    %2467 = vmatpush1.msra.mxu0 %v2335
    %2468 = vmatprep.subr.mxu0 0.0
    %2469 = vmatpush1.msra.mxu0 %v2336
    %2470 = vmatprep.subr.mxu0 0.0
    %2471 = vmatpush1.msra.mxu0 %v2337
    %2472 = vmatprep.subr.mxu0 0.0
    %2473 = vmatpush1.msra.mxu0 %v2338
    %2474 = vmatprep.subr.mxu0 0.0
    %2475 = vmatpush1.msra.mxu0 %v2339
    %2476 = vmatprep.subr.mxu0 0.0
    %2477 = vmatpush1.msra.mxu0 %v2340
    %2478 = vmatprep.subr.mxu0 0.0
    %2479 = vmatpush1.msra.mxu0 %v2341
    %2480 = vmatprep.subr.mxu0 0.0
    %2481 = vmatpush1.msra.mxu0 %v2342
    %2482 = vmatprep.subr.mxu0 0.0
    %2483 = vmatpush1.msra.mxu0 %v2343
    %2484 = vmatprep.subr.mxu0 0.0
    %2485 = vmatpush1.msra.mxu0 %v2344
    %2486 = vmatprep.mubr.f32.mxu0 %v2280
    %2487 = vmatmul.mubr.f32.gmra.mrb[0].mxu0 %v2279
    %v2488 = vpop.f32.mrb[0].mxu0
    %v2489 = vadd.f32 %v2419, %v2488
    %v2490 = vpop.f32.mrb[0].mxu0
    %2491 = vdwg.mxu0
    %vm2492 = vcmask 25600
    %2493 = vst.msk [vmem:[#allocation5] sm:$0x3] %vm2492, %v2489
    // Predicated region
    $region42: #{refine_forward.1} parent=1 // pred_check
      _
    $region43: #{refine_forward.1} parent=1 // pred_check_branch
      %2495 = sbr.rel (0) target = $region45
    $region44: #{refine_forward.1} parent=1 // pred_region
      %s2497 = ssub.s32 32, 32
      %2498 = vsyncadd [#allocation4], %s2497
      %s2500 = sshll.u32 [#allocation5], 4
      %s2501 = int_to_ptr.vmem [resolvable:$true] %s2500
      %2503 = dma.vmem_to_hbm [thread:$0]  %s2501, 32, %s9, [#allocation4]
    $region45: #{refine_forward.1} parent=1 // pred_fallthru
      _
    // Predicated region
    $region46: #{refine_forward.1} parent=1 // pred_check
      _
    $region47: #{refine_forward.1} parent=1 // pred_check_branch
      %2505 = sbr.rel (0) target = $region49
    $region48: #{refine_forward.1} parent=1 // pred_region
      %2506 = dma.done [#allocation4], 32
    $region49: #{refine_forward.1} parent=1 // pred_fallthru
      _
    %2507 = vsyncpa [#allocation3], 1
    %2508 = vsyncpa [#allocation4], 1

</llo_original>
